<compile_context>
chip_gen: v5e
topology: v5e:2x2
jax: 0.10.0
libtpu: 0.0.40
codegen_flags: <defaults>
</compile_context>

<pallas_src>
import jax
import jax.numpy as jnp
from jax.experimental import pallas as pl
from jax.experimental.pallas import tpu as pltpu

_LANE = 128


def _round_up(a, b):
    return (a + b - 1) // b * b


# ---------------------------------------------------------------------------
# Kernels
# ---------------------------------------------------------------------------
def _conv1_kernel(a_ref, xk_ref, xi_ref, w1_ref, b1_ref, w2_ref, b2_ref,
                  h_ref, acc_ref):
    """GINConv1 + post-ReLU:  h_i = relu(MLP((1+eps)*x_i + sum_j A[i,j] x_j))."""
    k = pl.program_id(1)

    @pl.when(k == 0)
    def _():
        acc_ref[...] = jnp.zeros_like(acc_ref)

    # Aggregation tile: bf16 x bf16 -> f32 on the MXU (multiplicities exact in bf16).
    acc_ref[...] += jnp.dot(a_ref[...], xk_ref[...],
                            preferred_element_type=jnp.float32)

    @pl.when(k == pl.num_programs(1) - 1)
    def _():
        h = xi_ref[...] + acc_ref[...]            # (1+eps)*x_i + agg, eps = 0 (f32 self term)
        h = jnp.dot(h, w1_ref[...], preferred_element_type=jnp.float32) + b1_ref[...]
        h = jnp.maximum(h, 0.0)                   # ReLU inside nn1
        h = jnp.dot(h, w2_ref[...], preferred_element_type=jnp.float32) + b2_ref[...]
        # F.relu after conv1; Dropout(0.5) is identity in eval mode.
        # TODO(synk): training-mode dropout would draw the Bernoulli mask in-kernel
        # via pltpu.prng_seed / pltpu.prng_random_bits.
        h_ref[...] = jnp.maximum(h, 0.0)


def _conv2_kernel(a_ref, hk_ref, hi_ref, w3_ref, b3_ref, out_ref, acc_ref):
    """GINConv2:  out_i = W3 @ ((1+eps)*h_i + sum_j A[i,j] h_j) + b3."""
    k = pl.program_id(1)

    @pl.when(k == 0)
    def _():
        acc_ref[...] = jnp.zeros_like(acc_ref)

    acc_ref[...] += jnp.dot(a_ref[...], hk_ref[...],
                            preferred_element_type=jnp.float32)

    @pl.when(k == pl.num_programs(1) - 1)
    def _():
        h2 = hi_ref[...] + acc_ref[...]
        out_ref[...] = (jnp.dot(h2, w3_ref[...], preferred_element_type=jnp.float32)
                        + b3_ref[...]).astype(out_ref.dtype)


# ---------------------------------------------------------------------------
# Wrapper
# ---------------------------------------------------------------------------
def _gin_layer(adj_bf16, feat_f32, feat_bf16, weights, kernel, out_width, tm, tk):
    """One GIN layer: tiled A@feat aggregation + per-row-tile MLP finalize."""
    n_pad = adj_bf16.shape[0]
    c_in = feat_f32.shape[1]
    grid = (n_pad // tm, n_pad // tk)

    def pinned(shape):                      # constant block, never re-fetched
        return pl.BlockSpec(shape, lambda i, k: (0, 0))

    w_specs = [pinned(w.shape) for w in weights]

    return pl.pallas_call(
        kernel,
        out_shape=jax.ShapeDtypeStruct((n_pad, out_width), jnp.float32),
        grid_spec=pltpu.PrefetchScalarGridSpec(
            num_scalar_prefetch=0,
            grid=grid,
            in_specs=[
                pl.BlockSpec((tm, tk), lambda i, k: (i, k)),     # A tile (bf16)
                pl.BlockSpec((tk, c_in), lambda i, k: (k, 0)),   # source features (bf16)
                pl.BlockSpec((tm, c_in), lambda i, k: (i, 0)),   # self features (f32)
            ] + w_specs,
            out_specs=pl.BlockSpec((tm, out_width), lambda i, k: (i, 0)),
            scratch_shapes=[pltpu.VMEM((tm, c_in), jnp.float32)],
        ),
        compiler_params=pltpu.CompilerParams(
            dimension_semantics=("parallel", "arbitrary"),   # row axis -> 2 TCs on v7x
            vmem_limit_bytes=32 * 1024 * 1024,               # explicit; tiles ~2 MiB
        ),
    )(adj_bf16, feat_bf16, feat_f32, *weights)


def gin_net_forward(x, edge_index, params):
    """x: (N, in_c) f32, edge_index: (2, E) int32 (row 0 = src, row 1 = dst)."""
    n, in_c = x.shape
    w1, b1, w2, b2, w3, b3 = params
    hid = w1.shape[1]
    out_c = w3.shape[1]

    # Lane-dense padding of feature dims (MXU/vst efficiency).
    c_pad = _round_up(max(in_c, 1), _LANE)
    h_pad = _round_up(hid, _LANE)
    o_pad = _round_up(out_c, _LANE)

    # Node-axis tiling of the adjacency.
    if n <= 1024:
        tm, tk = 128, 128
    else:
        tm, tk = 256, 512        # 256 KiB bf16 A tile, ~2 MiB double-buffered total
    n_pad = _round_up(n, max(tm, tk))

    # Zero-pad nodes & features (padded nodes have zero adjacency rows/cols,
    # so they never contribute to real nodes and are sliced off at the end).
    x_p = jnp.zeros((n_pad, c_pad), jnp.float32).at[:n, :in_c].set(x)

    src, dst = edge_index[0], edge_index[1]
    # Dense adjacency A[dst, src] = edge multiplicity, stored bf16 (small ints: exact).
    # TODO(synk): for large sparse graphs, replace the dense O(N^2) adjacency with a
    # CSR / edge-id scalar-prefetch gather path (PrefetchScalarGridSpec + pl.Element).
    adj = (jnp.zeros((n_pad, n_pad), jnp.float32)
           .at[dst, src].add(1.0)).astype(jnp.bfloat16)

    def pad2(w, r, c):
        return jnp.zeros((r, c), jnp.float32).at[:w.shape[0], :w.shape[1]].set(w)

    w1p, b1p = pad2(w1, c_pad, h_pad), pad2(b1, 1, h_pad)
    w2p, b2p = pad2(w2, h_pad, h_pad), pad2(b2, 1, h_pad)
    w3p, b3p = pad2(w3, h_pad, o_pad), pad2(b3, 1, o_pad)

    # ---- GINConv1 + ReLU (+ eval-mode dropout = identity) -------------------
    h = _gin_layer(adj, x_p, x_p.astype(jnp.bfloat16),
                   (w1p, b1p, w2p, b2p), _conv1_kernel, h_pad, tm, tk)

    # ---- GINConv2 ------------------------------------------------------------
    out = _gin_layer(adj, h, h.astype(jnp.bfloat16),
                     (w3p, b3p), _conv2_kernel, o_pad, tm, tk)

    return out[:n, :out_c]


def gin_net_reference(x, edge_index, params):
    """Pure-JAX f32 reference of the PyTorch forward (eval mode)."""
    n = x.shape[0]
    src, dst = edge_index[0], edge_index[1]
    adj = jnp.zeros((n, n), jnp.float32).at[dst, src].add(1.0)
    w1, b1, w2, b2, w3, b3 = params
    h = x + adj @ x
    h = jnp.maximum(h @ w1 + b1, 0.0)
    h = h @ w2 + b2
    h = jnp.maximum(h, 0.0)
    h2 = h + adj @ h
    return h2 @ w3 + b3


def init_params(key, in_c, hid_c, out_c=2):
    """Deterministic init mirroring nn.Linear shapes (stored transposed:
    W has shape (fan_in, fan_out) so the kernel computes h @ W + b)."""
    ks = jax.random.split(key, 6)

    def lin(kw, kb, fan_in, fan_out):
        bound = 1.0 / jnp.sqrt(fan_in)
        w = jax.random.uniform(kw, (fan_in, fan_out), jnp.float32, -bound, bound)
        b = jax.random.uniform(kb, (1, fan_out), jnp.float32, -bound, bound)
        return w, b

    w1, b1 = lin(ks[0], ks[1], in_c, hid_c)     # nn1: Linear(in_c, hid_c)
    w2, b2 = lin(ks[2], ks[3], hid_c, hid_c)    # nn1: Linear(hid_c, hid_c)
    w3, b3 = lin(ks[4], ks[5], hid_c, out_c)    # nn2: Linear(hid_c, 2)
    return (w1, b1, w2, b2, w3, b3)


if __name__ == "__main__":
    key = jax.random.PRNGKey(0)
    k_x, k_e, k_p = jax.random.split(key, 3)

    N, IN_C, HID_C = 200, 8, 32      # pads to n_pad=256 -> grid=(2,2): exercises tiling
    E = 400

    x = jax.random.normal(k_x, (N, IN_C), jnp.float32)
    # Deterministic small random directed edge list (like list(G.edges()).t()).
    edge_index = jax.random.randint(k_e, (2, E), 0, N, jnp.int32)
    params = init_params(k_p, IN_C, HID_C, out_c=2)

    out = jax.jit(gin_net_forward)(x, edge_index, params)
    jax.block_until_ready(out)

    assert out.shape == (N, 2) and out.dtype == jnp.float32
    # bf16 aggregation operands => allow small deviation from the pure-f32 reference.
    ref = gin_net_reference(x, edge_index, params)
    assert jnp.allclose(out, ref, atol=1e-1, rtol=1e-1), float(jnp.max(jnp.abs(out - ref)))

    print("KERNEL_OK")
</pallas_src>

<mosaic_0001>
module attributes {stable_mosaic.version = 11 : i64} {
  func.func @_conv1_kernel(%arg0: i32, %arg1: i32, %arg2: memref<128x128xbf16, #tpu.memory_space<vmem>>, %arg3: memref<128x128xbf16, #tpu.memory_space<vmem>>, %arg4: memref<128x128xf32, #tpu.memory_space<vmem>>, %arg5: memref<128x128xf32, #tpu.memory_space<vmem>>, %arg6: memref<1x128xf32, #tpu.memory_space<vmem>>, %arg7: memref<128x128xf32, #tpu.memory_space<vmem>>, %arg8: memref<1x128xf32, #tpu.memory_space<vmem>>, %arg9: memref<128x128xf32, #tpu.memory_space<vmem>>, %arg10: memref<128x128xf32, #tpu.memory_space<vmem>>) attributes {dimension_semantics = [#tpu.dimension_semantics<parallel>, #tpu.dimension_semantics<arbitrary>], iteration_bounds = array<i64: 2, 2>, scalar_prefetch = 0 : i64, scratch_operands = 1 : i64, tpu.core_type = #tpu.core_type<tc>, window_params = [{transform_indices = @transform_0, window_bounds = array<i64: 128, 128>}, {transform_indices = @transform_1, window_bounds = array<i64: 128, 128>}, {transform_indices = @transform_2, window_bounds = array<i64: 128, 128>}, {pipeline_mode = #tpu.pipeline_mode<synchronous>, transform_indices = @transform_3, window_bounds = array<i64: 128, 128>}, {pipeline_mode = #tpu.pipeline_mode<synchronous>, transform_indices = @transform_4, window_bounds = array<i64: 1, 128>}, {pipeline_mode = #tpu.pipeline_mode<synchronous>, transform_indices = @transform_5, window_bounds = array<i64: 128, 128>}, {pipeline_mode = #tpu.pipeline_mode<synchronous>, transform_indices = @transform_6, window_bounds = array<i64: 1, 128>}, {transform_indices = @transform_7, window_bounds = array<i64: 128, 128>}]} {
    %c0_i32 = arith.constant 0 : i32
    %0 = arith.cmpi eq, %arg1, %c0_i32 : i32
    %1 = arith.extui %0 : i1 to i32
    %c0_i32_0 = arith.constant 0 : i32
    %2 = arith.cmpi ne, %1, %c0_i32_0 : i32
    scf.if %2 {
      %cst_9 = arith.constant 0.000000e+00 : f32
      %12 = vector.broadcast %cst_9 : f32 to vector<128x128xf32>
      %c0_10 = arith.constant 0 : index
      %c0_11 = arith.constant 0 : index
      %13 = vector.load %arg10[%c0_10, %c0_11] : memref<128x128xf32, #tpu.memory_space<vmem>>, vector<128x128xf32>
      tpu.vector_store %arg10[%c0_10, %c0_11], %12 {strides = array<i32>} : memref<128x128xf32, #tpu.memory_space<vmem>>, vector<128x128xf32>,
    } else {
    }
    %c0 = arith.constant 0 : index
    %c0_1 = arith.constant 0 : index
    %3 = vector.load %arg10[%c0, %c0_1] : memref<128x128xf32, #tpu.memory_space<vmem>>, vector<128x128xf32>
    %c0_2 = arith.constant 0 : index
    %c0_3 = arith.constant 0 : index
    %4 = vector.load %arg2[%c0_2, %c0_3] : memref<128x128xbf16, #tpu.memory_space<vmem>>, vector<128x128xbf16>
    %c0_4 = arith.constant 0 : index
    %c0_5 = arith.constant 0 : index
    %5 = vector.load %arg3[%c0_4, %c0_5] : memref<128x128xbf16, #tpu.memory_space<vmem>>, vector<128x128xbf16>
    %cst = arith.constant dense<0.000000e+00> : vector<128x128xf32>
    %6 = tpu.matmul %4, %5, %cst {dimension_numbers = #tpu.dot_dimension_numbers<[1], [0], [0], [1], [0, 0, 1, 1], [], []>} : vector<128x128xbf16>, vector<128x128xbf16>, vector<128x128xf32> -> vector<128x128xf32>
    %7 = arith.addf %3, %6 : vector<128x128xf32>
    %c0_6 = arith.constant 0 : index
    %c0_7 = arith.constant 0 : index
    %8 = vector.load %arg10[%c0_6, %c0_7] : memref<128x128xf32, #tpu.memory_space<vmem>>, vector<128x128xf32>
    tpu.vector_store %arg10[%c0_6, %c0_7], %7 {strides = array<i32>} : memref<128x128xf32, #tpu.memory_space<vmem>>, vector<128x128xf32>,
    %c1_i32 = arith.constant 1 : i32
    %9 = arith.cmpi eq, %arg1, %c1_i32 : i32
    %10 = arith.extui %9 : i1 to i32
    %c0_i32_8 = arith.constant 0 : i32
    %11 = arith.cmpi ne, %10, %c0_i32_8 : i32
    scf.if %11 {
      %c0_9 = arith.constant 0 : index
      %c0_10 = arith.constant 0 : index
      %12 = vector.load %arg4[%c0_9, %c0_10] : memref<128x128xf32, #tpu.memory_space<vmem>>, vector<128x128xf32>
      %c0_11 = arith.constant 0 : index
      %c0_12 = arith.constant 0 : index
      %13 = vector.load %arg10[%c0_11, %c0_12] : memref<128x128xf32, #tpu.memory_space<vmem>>, vector<128x128xf32>
      %14 = arith.addf %12, %13 : vector<128x128xf32>
      %c0_13 = arith.constant 0 : index
      %c0_14 = arith.constant 0 : index
      %15 = vector.load %arg5[%c0_13, %c0_14] : memref<128x128xf32, #tpu.memory_space<vmem>>, vector<128x128xf32>
      %cst_15 = arith.constant dense<0.000000e+00> : vector<128x128xf32>
      %16 = tpu.matmul %14, %15, %cst_15 {dimension_numbers = #tpu.dot_dimension_numbers<[1], [0], [0], [1], [0, 0, 1, 1], [], []>} : vector<128x128xf32>, vector<128x128xf32>, vector<128x128xf32> -> vector<128x128xf32>
      %c0_16 = arith.constant 0 : index
      %c0_17 = arith.constant 0 : index
      %17 = vector.load %arg6[%c0_16, %c0_17] : memref<1x128xf32, #tpu.memory_space<vmem>>, vector<1x128xf32>
      %18 = vector.broadcast %17 : vector<1x128xf32> to vector<128x128xf32>
      %19 = arith.addf %16, %18 : vector<128x128xf32>
      %cst_18 = arith.constant 0.000000e+00 : f32
      %20 = vector.broadcast %cst_18 : f32 to vector<128x128xf32>
      %21 = arith.maximumf %19, %20 : vector<128x128xf32>
      %c0_19 = arith.constant 0 : index
      %c0_20 = arith.constant 0 : index
      %22 = vector.load %arg7[%c0_19, %c0_20] : memref<128x128xf32, #tpu.memory_space<vmem>>, vector<128x128xf32>
      %cst_21 = arith.constant dense<0.000000e+00> : vector<128x128xf32>
      %23 = tpu.matmul %21, %22, %cst_21 {dimension_numbers = #tpu.dot_dimension_numbers<[1], [0], [0], [1], [0, 0, 1, 1], [], []>} : vector<128x128xf32>, vector<128x128xf32>, vector<128x128xf32> -> vector<128x128xf32>
      %c0_22 = arith.constant 0 : index
      %c0_23 = arith.constant 0 : index
      %24 = vector.load %arg8[%c0_22, %c0_23] : memref<1x128xf32, #tpu.memory_space<vmem>>, vector<1x128xf32>
      %25 = vector.broadcast %24 : vector<1x128xf32> to vector<128x128xf32>
      %26 = arith.addf %23, %25 : vector<128x128xf32>
      %cst_24 = arith.constant 0.000000e+00 : f32
      %27 = vector.broadcast %cst_24 : f32 to vector<128x128xf32>
      %28 = arith.maximumf %26, %27 : vector<128x128xf32>
      %c0_25 = arith.constant 0 : index
      %c0_26 = arith.constant 0 : index
      %29 = vector.load %arg9[%c0_25, %c0_26] : memref<128x128xf32, #tpu.memory_space<vmem>>, vector<128x128xf32>
      tpu.vector_store %arg9[%c0_25, %c0_26], %28 {strides = array<i32>} : memref<128x128xf32, #tpu.memory_space<vmem>>, vector<128x128xf32>,
    } else {
    }
    return
  }
  func.func @transform_0(%arg0: i32, %arg1: i32) -> (i32, i32) {
    %c0_i32 = arith.constant 0 : i32
    return %arg0, %arg1 : i32, i32
  }
  func.func @transform_1(%arg0: i32, %arg1: i32) -> (i32, i32) {
    %c0_i32 = arith.constant 0 : i32
    %c0_i32_0 = arith.constant 0 : i32
    return %arg1, %c0_i32 : i32, i32
  }
  func.func @transform_2(%arg0: i32, %arg1: i32) -> (i32, i32) {
    %c0_i32 = arith.constant 0 : i32
    %c0_i32_0 = arith.constant 0 : i32
    return %arg0, %c0_i32 : i32, i32
  }
  func.func @transform_3(%arg0: i32, %arg1: i32) -> (i32, i32) {
    %c0_i32 = arith.constant 0 : i32
    %c0_i32_0 = arith.constant 0 : i32
    %c0_i32_1 = arith.constant 0 : i32
    return %c0_i32, %c0_i32_0 : i32, i32
  }
  func.func @transform_4(%arg0: i32, %arg1: i32) -> (i32, i32) {
    %c0_i32 = arith.constant 0 : i32
    %c0_i32_0 = arith.constant 0 : i32
    %c0_i32_1 = arith.constant 0 : i32
    return %c0_i32, %c0_i32_0 : i32, i32
  }
  func.func @transform_5(%arg0: i32, %arg1: i32) -> (i32, i32) {
    %c0_i32 = arith.constant 0 : i32
    %c0_i32_0 = arith.constant 0 : i32
    %c0_i32_1 = arith.constant 0 : i32
    return %c0_i32, %c0_i32_0 : i32, i32
  }
  func.func @transform_6(%arg0: i32, %arg1: i32) -> (i32, i32) {
    %c0_i32 = arith.constant 0 : i32
    %c0_i32_0 = arith.constant 0 : i32
    %c0_i32_1 = arith.constant 0 : i32
    return %c0_i32, %c0_i32_0 : i32, i32
  }
  func.func @transform_7(%arg0: i32, %arg1: i32) -> (i32, i32) {
    %c0_i32 = arith.constant 0 : i32
    %c0_i32_0 = arith.constant 0 : i32
    return %arg0, %c0_i32 : i32, i32
  }
}

module attributes {stable_mosaic.version = 11 : i64} {
  func.func @_conv2_kernel(%arg0: i32, %arg1: i32, %arg2: memref<128x128xbf16, #tpu.memory_space<vmem>>, %arg3: memref<128x128xbf16, #tpu.memory_space<vmem>>, %arg4: memref<128x128xf32, #tpu.memory_space<vmem>>, %arg5: memref<128x128xf32, #tpu.memory_space<vmem>>, %arg6: memref<1x128xf32, #tpu.memory_space<vmem>>, %arg7: memref<128x128xf32, #tpu.memory_space<vmem>>, %arg8: memref<128x128xf32, #tpu.memory_space<vmem>>) attributes {dimension_semantics = [#tpu.dimension_semantics<parallel>, #tpu.dimension_semantics<arbitrary>], iteration_bounds = array<i64: 2, 2>, scalar_prefetch = 0 : i64, scratch_operands = 1 : i64, tpu.core_type = #tpu.core_type<tc>, window_params = [{transform_indices = @transform_0, window_bounds = array<i64: 128, 128>}, {transform_indices = @transform_1, window_bounds = array<i64: 128, 128>}, {transform_indices = @transform_2, window_bounds = array<i64: 128, 128>}, {pipeline_mode = #tpu.pipeline_mode<synchronous>, transform_indices = @transform_3, window_bounds = array<i64: 128, 128>}, {pipeline_mode = #tpu.pipeline_mode<synchronous>, transform_indices = @transform_4, window_bounds = array<i64: 1, 128>}, {transform_indices = @transform_5, window_bounds = array<i64: 128, 128>}]} {
    %c0_i32 = arith.constant 0 : i32
    %0 = arith.cmpi eq, %arg1, %c0_i32 : i32
    %1 = arith.extui %0 : i1 to i32
    %c0_i32_0 = arith.constant 0 : i32
    %2 = arith.cmpi ne, %1, %c0_i32_0 : i32
    scf.if %2 {
      %cst_9 = arith.constant 0.000000e+00 : f32
      %12 = vector.broadcast %cst_9 : f32 to vector<128x128xf32>
      %c0_10 = arith.constant 0 : index
      %c0_11 = arith.constant 0 : index
      %13 = vector.load %arg8[%c0_10, %c0_11] : memref<128x128xf32, #tpu.memory_space<vmem>>, vector<128x128xf32>
      tpu.vector_store %arg8[%c0_10, %c0_11], %12 {strides = array<i32>} : memref<128x128xf32, #tpu.memory_space<vmem>>, vector<128x128xf32>,
    } else {
    }
    %c0 = arith.constant 0 : index
    %c0_1 = arith.constant 0 : index
    %3 = vector.load %arg8[%c0, %c0_1] : memref<128x128xf32, #tpu.memory_space<vmem>>, vector<128x128xf32>
    %c0_2 = arith.constant 0 : index
    %c0_3 = arith.constant 0 : index
    %4 = vector.load %arg2[%c0_2, %c0_3] : memref<128x128xbf16, #tpu.memory_space<vmem>>, vector<128x128xbf16>
    %c0_4 = arith.constant 0 : index
    %c0_5 = arith.constant 0 : index
    %5 = vector.load %arg3[%c0_4, %c0_5] : memref<128x128xbf16, #tpu.memory_space<vmem>>, vector<128x128xbf16>
    %cst = arith.constant dense<0.000000e+00> : vector<128x128xf32>
    %6 = tpu.matmul %4, %5, %cst {dimension_numbers = #tpu.dot_dimension_numbers<[1], [0], [0], [1], [0, 0, 1, 1], [], []>} : vector<128x128xbf16>, vector<128x128xbf16>, vector<128x128xf32> -> vector<128x128xf32>
    %7 = arith.addf %3, %6 : vector<128x128xf32>
    %c0_6 = arith.constant 0 : index
    %c0_7 = arith.constant 0 : index
    %8 = vector.load %arg8[%c0_6, %c0_7] : memref<128x128xf32, #tpu.memory_space<vmem>>, vector<128x128xf32>
    tpu.vector_store %arg8[%c0_6, %c0_7], %7 {strides = array<i32>} : memref<128x128xf32, #tpu.memory_space<vmem>>, vector<128x128xf32>,
    %c1_i32 = arith.constant 1 : i32
    %9 = arith.cmpi eq, %arg1, %c1_i32 : i32
    %10 = arith.extui %9 : i1 to i32
    %c0_i32_8 = arith.constant 0 : i32
    %11 = arith.cmpi ne, %10, %c0_i32_8 : i32
    scf.if %11 {
      %c0_9 = arith.constant 0 : index
      %c0_10 = arith.constant 0 : index
      %12 = vector.load %arg4[%c0_9, %c0_10] : memref<128x128xf32, #tpu.memory_space<vmem>>, vector<128x128xf32>
      %c0_11 = arith.constant 0 : index
      %c0_12 = arith.constant 0 : index
      %13 = vector.load %arg8[%c0_11, %c0_12] : memref<128x128xf32, #tpu.memory_space<vmem>>, vector<128x128xf32>
      %14 = arith.addf %12, %13 : vector<128x128xf32>
      %c0_13 = arith.constant 0 : index
      %c0_14 = arith.constant 0 : index
      %15 = vector.load %arg5[%c0_13, %c0_14] : memref<128x128xf32, #tpu.memory_space<vmem>>, vector<128x128xf32>
      %cst_15 = arith.constant dense<0.000000e+00> : vector<128x128xf32>
      %16 = tpu.matmul %14, %15, %cst_15 {dimension_numbers = #tpu.dot_dimension_numbers<[1], [0], [0], [1], [0, 0, 1, 1], [], []>} : vector<128x128xf32>, vector<128x128xf32>, vector<128x128xf32> -> vector<128x128xf32>
      %c0_16 = arith.constant 0 : index
      %c0_17 = arith.constant 0 : index
      %17 = vector.load %arg6[%c0_16, %c0_17] : memref<1x128xf32, #tpu.memory_space<vmem>>, vector<1x128xf32>
      %18 = vector.broadcast %17 : vector<1x128xf32> to vector<128x128xf32>
      %19 = arith.addf %16, %18 : vector<128x128xf32>
      %c0_18 = arith.constant 0 : index
      %c0_19 = arith.constant 0 : index
      %20 = vector.load %arg7[%c0_18, %c0_19] : memref<128x128xf32, #tpu.memory_space<vmem>>, vector<128x128xf32>
      tpu.vector_store %arg7[%c0_18, %c0_19], %19 {strides = array<i32>} : memref<128x128xf32, #tpu.memory_space<vmem>>, vector<128x128xf32>,
    } else {
    }
    return
  }
  func.func @transform_0(%arg0: i32, %arg1: i32) -> (i32, i32) {
    %c0_i32 = arith.constant 0 : i32
    return %arg0, %arg1 : i32, i32
  }
  func.func @transform_1(%arg0: i32, %arg1: i32) -> (i32, i32) {
    %c0_i32 = arith.constant 0 : i32
    %c0_i32_0 = arith.constant 0 : i32
    return %arg1, %c0_i32 : i32, i32
  }
  func.func @transform_2(%arg0: i32, %arg1: i32) -> (i32, i32) {
    %c0_i32 = arith.constant 0 : i32
    %c0_i32_0 = arith.constant 0 : i32
    return %arg0, %c0_i32 : i32, i32
  }
  func.func @transform_3(%arg0: i32, %arg1: i32) -> (i32, i32) {
    %c0_i32 = arith.constant 0 : i32
    %c0_i32_0 = arith.constant 0 : i32
    %c0_i32_1 = arith.constant 0 : i32
    return %c0_i32, %c0_i32_0 : i32, i32
  }
  func.func @transform_4(%arg0: i32, %arg1: i32) -> (i32, i32) {
    %c0_i32 = arith.constant 0 : i32
    %c0_i32_0 = arith.constant 0 : i32
    %c0_i32_1 = arith.constant 0 : i32
    return %c0_i32, %c0_i32_0 : i32, i32
  }
  func.func @transform_5(%arg0: i32, %arg1: i32) -> (i32, i32) {
    %c0_i32 = arith.constant 0 : i32
    %c0_i32_0 = arith.constant 0 : i32
    return %arg0, %c0_i32 : i32, i32
  }
}

</mosaic_0001>

<llo_original>
// kernel: gin_net_forward.2
$region0: #{gin_net_forward.2}
  #allocation0 [shape = 'u32[]', space=smem, size = 0x4, offset = 0x4, fixed_abs, tag = 'smem constant byte address 0x4 - core index']
  #allocation1 [shape = 'u32[72,128]{1,0:T(1,128)}', space=vmem, size = 0x9000, scoped, tag = 'internal scratch']
  #allocation2 [shape = 'f32[128,128]{1,0:T(8,128)}', space=vmem, size = 0x10000, scoped, tag = 'scratch operand']
  %s0 = inlined_call_operand.vmem [shape: bf16[256,256], index: 0, kind: input, shape index: {}]
  %s1 = inlined_call_operand.vmem [shape: bf16[256,128], index: 1, kind: input, shape index: {}]
  %s2 = inlined_call_operand.vmem [shape: f32[256,128], index: 2, kind: input, shape index: {}]
  %s3 = inlined_call_operand.vmem [shape: f32[128,128], index: 3, kind: input, shape index: {}]
  %s4 = inlined_call_operand.vmem [shape: f32[1,128], index: 4, kind: input, shape index: {}]
  %s5 = inlined_call_operand.vmem [shape: f32[128,128], index: 5, kind: input, shape index: {}]
  %s6 = inlined_call_operand.vmem [shape: f32[1,128], index: 6, kind: input, shape index: {}]
  %s7 = inlined_call_operand.vmem [shape: f32[256,128], index: 7, kind: output, shape index: {}]
  %s8 = sld [smem:[#allocation0]]
  $region110: #{gin_net_forward.2} parent=0
    _
  %s10 = ssub.s32 1, %s8
  %s11 = scalar_select 0, %s10, %s8
  $region1: #{gin_net_forward.2} parent=0
    #allocation3 [shape = 'u8[65536]{0}', space=vmem, size = 0x10000, scoped, tag = 'input window, operand 0']
    loop: start=0, step=1, limit=6
    $region2: #{gin_net_forward.2} parent=1 // loop_pre_header
      _
    $region3: #{gin_net_forward.2} parent=1 // loop_header
      %s13 = sphi 0, %s17
      %p14 = scmp.ge.s32.totalorder %s13, 6
      %s20 = sphi 0, %s32
      %s21 = sphi 0, %s28
      %s22 = sphi 0, %s20
      %s23 = sphi 0, %s21
      %s24 = sphi 0, %s22
      %s25 = sphi 0, %s23
      %s37 = sphi 0, %s39
      %s40 = sphi 0, %s37
      %s41 = sphi 0, %s40
      %s57 = sphi 0, %s41
      %s63 = sphi 0, %s65
      %s66 = sphi 0, %s63
      %s67 = sphi 0, %s66
      %s83 = sphi 0, %s67
      %s89 = sphi 0, %s91
      %s92 = sphi 0, %s89
      %s93 = sphi 0, %s92
      %s109 = sphi 0, %s93
      %s113 = sphi 0, %s113
      %s115 = sphi 0, %s113
      %s116 = sphi 0, %s115
      %s130 = sphi 0, %s116
      %s134 = sphi 0, %s134
      %s136 = sphi 0, %s134
      %s137 = sphi 0, %s136
      %s151 = sphi 0, %s137
      %s155 = sphi 0, %s155
      %s157 = sphi 0, %s155
      %s158 = sphi 0, %s157
      %s172 = sphi 0, %s158
      %s176 = sphi 0, %s176
      %s178 = sphi 0, %s176
      %s179 = sphi 0, %s178
      %s193 = sphi 0, %s179
      %s199 = sphi 0, %s201
      %s202 = sphi 0, %s199
      %s203 = sphi 0, %s202
      %s219 = sphi 0, %s203
    $region4: #{gin_net_forward.2} parent=1 // loop_header_branch
      %16 = sbr.rel (%p14) target = $region8
    $region5: #{gin_net_forward.2} parent=1 // loop_body
      %s18 = ssub.s32 %s13, 1
      %s19 = ssub.s32 %s13, 2
      %s26 = sadd.s32 1, %s21
      %p27 = scmp.ge.s32.totalorder %s26, 2
      %s28 = scalar_select %p27, 0, %s26
      %s29 = sadd.s32 1, %s20
      %s30 = scalar_select %p27, %s29, %s20
      %p31 = scmp.ge.s32.totalorder %s30, 2
      %s32 = scalar_select %p31, 0, %s30
      %s33 = ssub.s32 %s20, %s32
      %s34 = ssub.s32 %s21, %s28
      %s35 = sor.u32 %s33, %s34
      %p36 = scmp.eq.s32.totalorder %s35, 0
      %s38 = sadd.s32 %s37, 1
      %s39 = scalar_select %p36, %s37, %s38
      %p42 = pneg %p36
      %p43 = scmp.eq.s32.totalorder %s13, 3
      %p44 = por %p42, %p43
      %p45 = scmp.ne.s32.totalorder %s37, %s40
      %p46 = scmp.eq.s32.totalorder %s13, 0
      %p47 = por %p45, %p46
      %p48 = scmp.ne.s32.totalorder %s37, %s40
      %p49 = scmp.eq.s32.totalorder %s18, 3
      %p50 = por %p48, %p49
      %p51 = scmp.ne.s32.totalorder %s40, %s41
      %p52 = scmp.eq.s32.totalorder %s18, 0
      %p53 = por %p51, %p52
      %p54 = scmp.ne.s32.totalorder %s40, %s41
      %p55 = scmp.eq.s32.totalorder %s19, 3
      %p56 = por %p54, %p55
      %p58 = scmp.ne.s32.totalorder %s41, %s57
      %p59 = scmp.eq.s32.totalorder %s19, 0
      %p60 = por %p58, %p59
      %s61 = ssub.s32 %s21, %s28
      %p62 = scmp.eq.s32.totalorder %s61, 0
      %s64 = sadd.s32 %s63, 1
      %s65 = scalar_select %p62, %s63, %s64
      %p68 = pneg %p62
      %p69 = scmp.eq.s32.totalorder %s13, 3
      %p70 = por %p68, %p69
      %p71 = scmp.ne.s32.totalorder %s63, %s66
      %p72 = scmp.eq.s32.totalorder %s13, 0
      %p73 = por %p71, %p72
      %p74 = scmp.ne.s32.totalorder %s63, %s66
      %p75 = scmp.eq.s32.totalorder %s18, 3
      %p76 = por %p74, %p75
      %p77 = scmp.ne.s32.totalorder %s66, %s67
      %p78 = scmp.eq.s32.totalorder %s18, 0
      %p79 = por %p77, %p78
      %p80 = scmp.ne.s32.totalorder %s66, %s67
      %p81 = scmp.eq.s32.totalorder %s19, 3
      %p82 = por %p80, %p81
      %p84 = scmp.ne.s32.totalorder %s67, %s83
      %p85 = scmp.eq.s32.totalorder %s19, 0
      %p86 = por %p84, %p85
      %s87 = ssub.s32 %s20, %s32
      %p88 = scmp.eq.s32.totalorder %s87, 0
      %s90 = sadd.s32 %s89, 1
      %s91 = scalar_select %p88, %s89, %s90
      %p94 = pneg %p88
      %p95 = scmp.eq.s32.totalorder %s13, 3
      %p96 = por %p94, %p95
      %p97 = scmp.ne.s32.totalorder %s89, %s92
      %p98 = scmp.eq.s32.totalorder %s13, 0
      %p99 = por %p97, %p98
      %p100 = scmp.ne.s32.totalorder %s89, %s92
      %p101 = scmp.eq.s32.totalorder %s18, 3
      %p102 = por %p100, %p101
      %p103 = scmp.ne.s32.totalorder %s92, %s93
      %p104 = scmp.eq.s32.totalorder %s18, 0
      %p105 = por %p103, %p104
      %p106 = scmp.ne.s32.totalorder %s92, %s93
      %p107 = scmp.eq.s32.totalorder %s19, 3
      %p108 = por %p106, %p107
      %p110 = scmp.ne.s32.totalorder %s93, %s109
      %p111 = scmp.eq.s32.totalorder %s19, 0
      %p112 = por %p110, %p111
      %s114 = sadd.s32 %s113, 1
      %p117 = scmp.eq.s32.totalorder %s13, 3
      %p118 = scmp.ne.s32.totalorder %s113, %s115
      %p119 = scmp.eq.s32.totalorder %s13, 0
      %p120 = por %p118, %p119
      %p121 = scmp.ne.s32.totalorder %s113, %s115
      %p122 = scmp.eq.s32.totalorder %s18, 3
      %p123 = por %p121, %p122
      %p124 = scmp.ne.s32.totalorder %s115, %s116
      %p125 = scmp.eq.s32.totalorder %s18, 0
      %p126 = por %p124, %p125
      %p127 = scmp.ne.s32.totalorder %s115, %s116
      %p128 = scmp.eq.s32.totalorder %s19, 3
      %p129 = por %p127, %p128
      %p131 = scmp.ne.s32.totalorder %s116, %s130
      %p132 = scmp.eq.s32.totalorder %s19, 0
      %p133 = por %p131, %p132
      %s135 = sadd.s32 %s134, 1
      %p138 = scmp.eq.s32.totalorder %s13, 3
      %p139 = scmp.ne.s32.totalorder %s134, %s136
      %p140 = scmp.eq.s32.totalorder %s13, 0
      %p141 = por %p139, %p140
      %p142 = scmp.ne.s32.totalorder %s134, %s136
      %p143 = scmp.eq.s32.totalorder %s18, 3
      %p144 = por %p142, %p143
      %p145 = scmp.ne.s32.totalorder %s136, %s137
      %p146 = scmp.eq.s32.totalorder %s18, 0
      %p147 = por %p145, %p146
      %p148 = scmp.ne.s32.totalorder %s136, %s137
      %p149 = scmp.eq.s32.totalorder %s19, 3
      %p150 = por %p148, %p149
      %p152 = scmp.ne.s32.totalorder %s137, %s151
      %p153 = scmp.eq.s32.totalorder %s19, 0
      %p154 = por %p152, %p153
      %s156 = sadd.s32 %s155, 1
      %p159 = scmp.eq.s32.totalorder %s13, 3
      %p160 = scmp.ne.s32.totalorder %s155, %s157
      %p161 = scmp.eq.s32.totalorder %s13, 0
      %p162 = por %p160, %p161
      %p163 = scmp.ne.s32.totalorder %s155, %s157
      %p164 = scmp.eq.s32.totalorder %s18, 3
      %p165 = por %p163, %p164
      %p166 = scmp.ne.s32.totalorder %s157, %s158
      %p167 = scmp.eq.s32.totalorder %s18, 0
      %p168 = por %p166, %p167
      %p169 = scmp.ne.s32.totalorder %s157, %s158
      %p170 = scmp.eq.s32.totalorder %s19, 3
      %p171 = por %p169, %p170
      %p173 = scmp.ne.s32.totalorder %s158, %s172
      %p174 = scmp.eq.s32.totalorder %s19, 0
      %p175 = por %p173, %p174
      %s177 = sadd.s32 %s176, 1
      %p180 = scmp.eq.s32.totalorder %s13, 3
      %p181 = scmp.ne.s32.totalorder %s176, %s178
      %p182 = scmp.eq.s32.totalorder %s13, 0
      %p183 = por %p181, %p182
      %p184 = scmp.ne.s32.totalorder %s176, %s178
      %p185 = scmp.eq.s32.totalorder %s18, 3
      %p186 = por %p184, %p185
      %p187 = scmp.ne.s32.totalorder %s178, %s179
      %p188 = scmp.eq.s32.totalorder %s18, 0
      %p189 = por %p187, %p188
      %p190 = scmp.ne.s32.totalorder %s178, %s179
      %p191 = scmp.eq.s32.totalorder %s19, 3
      %p192 = por %p190, %p191
      %p194 = scmp.ne.s32.totalorder %s179, %s193
      %p195 = scmp.eq.s32.totalorder %s19, 0
      %p196 = por %p194, %p195
      %s197 = ssub.s32 %s20, %s32
      %p198 = scmp.eq.s32.totalorder %s197, 0
      %s200 = sadd.s32 %s199, 1
      %s201 = scalar_select %p198, %s199, %s200
      %p204 = pneg %p198
      %p205 = scmp.eq.s32.totalorder %s13, 3
      %p206 = por %p204, %p205
      %p207 = scmp.ne.s32.totalorder %s199, %s202
      %p208 = scmp.eq.s32.totalorder %s13, 0
      %p209 = por %p207, %p208
      %p210 = scmp.ne.s32.totalorder %s199, %s202
      %p211 = scmp.eq.s32.totalorder %s18, 3
      %p212 = por %p210, %p211
      %p213 = scmp.ne.s32.totalorder %s202, %s203
      %p214 = scmp.eq.s32.totalorder %s18, 0
      %p215 = por %p213, %p214
      %p216 = scmp.ne.s32.totalorder %s202, %s203
      %p217 = scmp.eq.s32.totalorder %s19, 3
      %p218 = por %p216, %p217
      %p220 = scmp.ne.s32.totalorder %s203, %s219
      %p221 = scmp.eq.s32.totalorder %s19, 0
      %p222 = por %p220, %p221
      %p223 = scmp.le.s32.totalorder 1, %s13
      %p224 = scmp.lt.s32.totalorder %s13, 5
      %p225 = pnand %p223, %p224
      %p226 = pneg %p225
      // Predicated region
      $region9: #{gin_net_forward.2} parent=5 // pred_check
        _
      $region10: #{gin_net_forward.2} parent=5 // pred_check_branch
        %228 = sbr.rel (%p225) target = $region12
      $region11: #{gin_net_forward.2} parent=5 // pred_region
        %s229 = ssub.s32 %s13, 1
        // Predicated region
        $region13: #{gin_net_forward.2} parent=11 // pred_check
          %p230 = pneg %p126
        $region14: #{gin_net_forward.2} parent=11 // pred_check_branch
          %232 = sbr.rel (%p230) target = $region16
        $region15: #{gin_net_forward.2} parent=11 // pred_region
          _
        $region16: #{gin_net_forward.2} parent=11 // pred_fallthru
          _
        // Predicated region
        $region17: #{gin_net_forward.2} parent=11 // pred_check
          %p233 = pneg %p147
        $region18: #{gin_net_forward.2} parent=11 // pred_check_branch
          %235 = sbr.rel (%p233) target = $region20
        $region19: #{gin_net_forward.2} parent=11 // pred_region
          _
        $region20: #{gin_net_forward.2} parent=11 // pred_fallthru
          _
        // Predicated region
        $region21: #{gin_net_forward.2} parent=11 // pred_check
          %p236 = pneg %p168
        $region22: #{gin_net_forward.2} parent=11 // pred_check_branch
          %238 = sbr.rel (%p236) target = $region24
        $region23: #{gin_net_forward.2} parent=11 // pred_region
          _
        $region24: #{gin_net_forward.2} parent=11 // pred_fallthru
          _
        // Predicated region
        $region25: #{gin_net_forward.2} parent=11 // pred_check
          %p239 = pneg %p189
        $region26: #{gin_net_forward.2} parent=11 // pred_check_branch
          %241 = sbr.rel (%p239) target = $region28
        $region27: #{gin_net_forward.2} parent=11 // pred_region
          _
        $region28: #{gin_net_forward.2} parent=11 // pred_fallthru
          _
      $region12: #{gin_net_forward.2} parent=5 // pred_fallthru
        _
      %p242 = scmp.lt.s32.totalorder %s13, 4
      // Predicated region
      $region29: #{gin_net_forward.2} parent=5 // pred_check
        %p243 = pneg %p242
      $region30: #{gin_net_forward.2} parent=5 // pred_check_branch
        %245 = sbr.rel (%p243) target = $region32
      $region31: #{gin_net_forward.2} parent=5 // pred_region
        // Predicated region
        $region33: #{gin_net_forward.2} parent=31 // pred_check
          %p246 = pneg %p47
        $region34: #{gin_net_forward.2} parent=31 // pred_check_branch
          %248 = sbr.rel (%p246) target = $region36
        $region35: #{gin_net_forward.2} parent=31 // pred_region
          %s249 = sand.u32 %s37, 1
          %s250 = sand.u32 %s37, 1
          %s251 = smul.addr %s250, 64
          %s252 = scalar_lea.vmem [#allocation3], %s251
          %s253 = smul.u32 16, %s20
          %s254 = smul.addr %s253, 2
          %s255 = sadd.s32 %s21, %s254
          %s256 = smul.addr %s255, 4
          %s257 = scalar_lea.vmem %s0, %s256
          // Predicated region
          $region37: #{gin_net_forward.2} parent=35 // pred_check
            _
          $region38: #{gin_net_forward.2} parent=35 // pred_check_branch
            %259 = sbr.rel (0) target = $region40
          $region39: #{gin_net_forward.2} parent=35 // pred_region
            // Predicated region
            $region41: #{gin_net_forward.2} parent=39 // pred_check
              _
            $region42: #{gin_net_forward.2} parent=39 // pred_check_branch
              %261 = sbr.rel target = $region44
            $region43: #{gin_net_forward.2} parent=39 // pred_region
              // Predicated region
              $region56: #{gin_net_forward.2} parent=43 // pred_check
                _
              $region57: #{gin_net_forward.2} parent=43 // pred_check_branch
                %307 = sbr.rel (0) target = $region59
              $region58: #{gin_net_forward.2} parent=43 // pred_region
                loop: start=0, step=1, limit=1
                $region60: #{gin_net_forward.2} parent=58 // loop_pre_header
                  _
                $region61: #{gin_net_forward.2} parent=58 // loop_header
                  %s309 = sphi 0, %s313
                  %p310 = scmp.ge.s32.totalorder %s309, 1
                  %s314 = sphi %s257, %s257
                  %s315 = sphi %s252, %s252
                $region62: #{gin_net_forward.2} parent=58 // loop_header_branch
                  %312 = sbr.rel (%p310) target = $region66
                $region63: #{gin_net_forward.2} parent=58 // loop_body
                  _
                $region64: #{gin_net_forward.2} parent=58 // loop_footer
                  %s313 = sadd.s32 1, %s309
                $region65: #{gin_net_forward.2} parent=58 // loop_footer_branch
                  %308 = sbr.rel target = $region61
                $region66: #{gin_net_forward.2} parent=58 // loop_exit
                  _
                %s317 = ssub.s32 16, 1
                loop: start=0, step=1, limit=1
                $region67: #{gin_net_forward.2} parent=58 // loop_pre_header
                  _
                $region68: #{gin_net_forward.2} parent=58 // loop_header
                  %s319 = sphi 0, %s323
                  %p320 = scmp.ge.s32.totalorder %s319, 1
                  %s324 = sphi %s257, %s257
                  %s325 = sphi %s252, %s252
                $region69: #{gin_net_forward.2} parent=58 // loop_header_branch
                  %322 = sbr.rel (%p320) target = $region73
                $region70: #{gin_net_forward.2} parent=58 // loop_body
                  %v326 = vld [vmem:[%s324] sm:%s317]
                  %327 = vst [vmem:[%s325] sm:%s317] %v326
                  %v328 = vld [vmem:[%s324 + $0x8] sm:%s317]
                  %329 = vst [vmem:[%s325 + $0x4] sm:%s317] %v328
                  %v330 = vld [vmem:[%s324 + $0x10] sm:%s317]
                  %331 = vst [vmem:[%s325 + $0x8] sm:%s317] %v330
                  %v332 = vld [vmem:[%s324 + $0x18] sm:%s317]
                  %333 = vst [vmem:[%s325 + $0xc] sm:%s317] %v332
                  %v334 = vld [vmem:[%s324 + $0x20] sm:%s317]
                  %335 = vst [vmem:[%s325 + $0x10] sm:%s317] %v334
                  %v336 = vld [vmem:[%s324 + $0x28] sm:%s317]
                  %337 = vst [vmem:[%s325 + $0x14] sm:%s317] %v336
                  %v338 = vld [vmem:[%s324 + $0x30] sm:%s317]
                  %339 = vst [vmem:[%s325 + $0x18] sm:%s317] %v338
                  %v340 = vld [vmem:[%s324 + $0x38] sm:%s317]
                  %341 = vst [vmem:[%s325 + $0x1c] sm:%s317] %v340
                  %v342 = vld [vmem:[%s324 + $0x40] sm:%s317]
                  %343 = vst [vmem:[%s325 + $0x20] sm:%s317] %v342
                  %v344 = vld [vmem:[%s324 + $0x48] sm:%s317]
                  %345 = vst [vmem:[%s325 + $0x24] sm:%s317] %v344
                  %v346 = vld [vmem:[%s324 + $0x50] sm:%s317]
                  %347 = vst [vmem:[%s325 + $0x28] sm:%s317] %v346
                  %v348 = vld [vmem:[%s324 + $0x58] sm:%s317]
                  %349 = vst [vmem:[%s325 + $0x2c] sm:%s317] %v348
                  %v350 = vld [vmem:[%s324 + $0x60] sm:%s317]
                  %351 = vst [vmem:[%s325 + $0x30] sm:%s317] %v350
                  %v352 = vld [vmem:[%s324 + $0x68] sm:%s317]
                  %353 = vst [vmem:[%s325 + $0x34] sm:%s317] %v352
                  %v354 = vld [vmem:[%s324 + $0x70] sm:%s317]
                  %355 = vst [vmem:[%s325 + $0x38] sm:%s317] %v354
                  %v356 = vld [vmem:[%s324 + $0x78] sm:%s317]
                  %357 = vst [vmem:[%s325 + $0x3c] sm:%s317] %v356
                $region71: #{gin_net_forward.2} parent=58 // loop_footer
                  %s323 = sadd.s32 1, %s319
                $region72: #{gin_net_forward.2} parent=58 // loop_footer_branch
                  %318 = sbr.rel target = $region68
                $region73: #{gin_net_forward.2} parent=58 // loop_exit
                  _
              $region59: #{gin_net_forward.2} parent=43 // pred_fallthru
                _
            $region44: #{gin_net_forward.2} parent=39 // pred_fallthru
              _
            // Predicated region
            $region45: #{gin_net_forward.2} parent=39 // pred_check
              _
            $region46: #{gin_net_forward.2} parent=39 // pred_check_branch
              %263 = sbr.rel (0) target = $region48
            $region47: #{gin_net_forward.2} parent=39 // pred_region
              %s265 = ssub.s32 16, 1
              loop: start=0, step=1, limit=1
              $region49: #{gin_net_forward.2} parent=47 // loop_pre_header
                _
              $region50: #{gin_net_forward.2} parent=47 // loop_header
                %s267 = sphi 0, %s271
                %p268 = scmp.ge.s32.totalorder %s267, 1
                %s272 = sphi %s257, %s257
                %s273 = sphi %s252, %s252
              $region51: #{gin_net_forward.2} parent=47 // loop_header_branch
                %270 = sbr.rel (%p268) target = $region55
              $region52: #{gin_net_forward.2} parent=47 // loop_body
                %v274 = vld [vmem:[%s272] sm:%s265]
                %275 = vst [vmem:[%s273] sm:%s265] %v274
                %v276 = vld [vmem:[%s272 + $0x8] sm:%s265]
                %277 = vst [vmem:[%s273 + $0x4] sm:%s265] %v276
                %v278 = vld [vmem:[%s272 + $0x10] sm:%s265]
                %279 = vst [vmem:[%s273 + $0x8] sm:%s265] %v278
                %v280 = vld [vmem:[%s272 + $0x18] sm:%s265]
                %281 = vst [vmem:[%s273 + $0xc] sm:%s265] %v280
                %v282 = vld [vmem:[%s272 + $0x20] sm:%s265]
                %283 = vst [vmem:[%s273 + $0x10] sm:%s265] %v282
                %v284 = vld [vmem:[%s272 + $0x28] sm:%s265]
                %285 = vst [vmem:[%s273 + $0x14] sm:%s265] %v284
                %v286 = vld [vmem:[%s272 + $0x30] sm:%s265]
                %287 = vst [vmem:[%s273 + $0x18] sm:%s265] %v286
                %v288 = vld [vmem:[%s272 + $0x38] sm:%s265]
                %289 = vst [vmem:[%s273 + $0x1c] sm:%s265] %v288
                %v290 = vld [vmem:[%s272 + $0x40] sm:%s265]
                %291 = vst [vmem:[%s273 + $0x20] sm:%s265] %v290
                %v292 = vld [vmem:[%s272 + $0x48] sm:%s265]
                %293 = vst [vmem:[%s273 + $0x24] sm:%s265] %v292
                %v294 = vld [vmem:[%s272 + $0x50] sm:%s265]
                %295 = vst [vmem:[%s273 + $0x28] sm:%s265] %v294
                %v296 = vld [vmem:[%s272 + $0x58] sm:%s265]
                %297 = vst [vmem:[%s273 + $0x2c] sm:%s265] %v296
                %v298 = vld [vmem:[%s272 + $0x60] sm:%s265]
                %299 = vst [vmem:[%s273 + $0x30] sm:%s265] %v298
                %v300 = vld [vmem:[%s272 + $0x68] sm:%s265]
                %301 = vst [vmem:[%s273 + $0x34] sm:%s265] %v300
                %v302 = vld [vmem:[%s272 + $0x70] sm:%s265]
                %303 = vst [vmem:[%s273 + $0x38] sm:%s265] %v302
                %v304 = vld [vmem:[%s272 + $0x78] sm:%s265]
                %305 = vst [vmem:[%s273 + $0x3c] sm:%s265] %v304
              $region53: #{gin_net_forward.2} parent=47 // loop_footer
                %s271 = sadd.s32 1, %s267
              $region54: #{gin_net_forward.2} parent=47 // loop_footer_branch
                %266 = sbr.rel target = $region50
              $region55: #{gin_net_forward.2} parent=47 // loop_exit
                _
            $region48: #{gin_net_forward.2} parent=39 // pred_fallthru
              _
          $region40: #{gin_net_forward.2} parent=35 // pred_fallthru
            _
          %358 = vnop
        $region36: #{gin_net_forward.2} parent=31 // pred_fallthru
          _
        // Predicated region
        $region74: #{gin_net_forward.2} parent=31 // pred_check
          %p359 = pneg %p73
        $region75: #{gin_net_forward.2} parent=31 // pred_check_branch
          %361 = sbr.rel (%p359) target = $region77
        $region76: #{gin_net_forward.2} parent=31 // pred_region
          %s362 = smul.u32 16, %s21
          %p363 = scmp.lt.s32.totalorder %s362, 31
          %s364 = scalar_select %p363, %s362, 31
          %s365 = smul.addr %s364, 4
          %s366 = scalar_lea.vmem %s1, %s365
          %s367 = smul.u32 16, %s21
        $region77: #{gin_net_forward.2} parent=31 // pred_fallthru
          _
        // Predicated region
        $region78: #{gin_net_forward.2} parent=31 // pred_check
          %p368 = pneg %p99
        $region79: #{gin_net_forward.2} parent=31 // pred_check_branch
          %370 = sbr.rel (%p368) target = $region81
        $region80: #{gin_net_forward.2} parent=31 // pred_region
          %s371 = smul.u32 16, %s20
          %p372 = scmp.lt.s32.totalorder %s371, 31
          %s373 = scalar_select %p372, %s371, 31
          %s374 = smul.addr %s373, 8
          %s375 = scalar_lea.vmem %s2, %s374
          %s376 = smul.u32 16, %s20
        $region81: #{gin_net_forward.2} parent=31 // pred_fallthru
          _
      $region32: #{gin_net_forward.2} parent=5 // pred_fallthru
        _
      %p377 = scmp.le.s32.totalorder 1, %s13
      %p378 = scmp.lt.s32.totalorder %s13, 5
      %p379 = pnand %p377, %p378
      %p380 = pneg %p379
      // Predicated region
      $region82: #{gin_net_forward.2} parent=5 // pred_check
        _
      $region83: #{gin_net_forward.2} parent=5 // pred_check_branch
        %382 = sbr.rel (%p379) target = $region85
      $region84: #{gin_net_forward.2} parent=5 // pred_region
        %s383 = ssub.s32 %s13, 1
        %s384 = sand.u32 %s40, 1
        %s385 = sand.u32 %s40, 1
        %s386 = smul.addr %s385, 64
        %s387 = scalar_lea.vmem [#allocation3], %s386
        // Predicated region
        $region86: #{gin_net_forward.2} parent=84 // pred_check
          %p388 = pneg %p53
        $region87: #{gin_net_forward.2} parent=84 // pred_check_branch
          %390 = sbr.rel (%p388) target = $region89
        $region88: #{gin_net_forward.2} parent=84 // pred_region
          _
        $region89: #{gin_net_forward.2} parent=84 // pred_fallthru
          _
        %s391 = sand.u32 %s40, 1
        %s392 = sand.u32 %s40, 1
        %s393 = smul.addr %s392, 64
        %s394 = scalar_lea.vmem [#allocation3], %s393
        %p395 = pneg %p53
        %p396 = pneg %p50
        %s397 = smul.u32 16, %s23
        %p398 = scmp.lt.s32.totalorder %s397, 31
        %s399 = scalar_select %p398, %s397, 31
        %s400 = smul.addr %s399, 4
        %s401 = scalar_lea.vmem %s1, %s400
        %p402 = pneg %p79
        %p403 = pneg %p76
        %s404 = smul.u32 16, %s22
        %p405 = scmp.lt.s32.totalorder %s404, 31
        %s406 = scalar_select %p405, %s404, 31
        %s407 = smul.addr %s406, 8
        %s408 = scalar_lea.vmem %s2, %s407
        %p409 = pneg %p105
        %p410 = pneg %p102
        %p411 = pneg %p126
        %p412 = pneg %p123
        %p413 = pneg %p147
        %p414 = pneg %p144
        %p415 = pneg %p168
        %p416 = pneg %p165
        %p417 = pneg %p189
        %p418 = pneg %p186
        %p419 = pneg %p215
        %p420 = pneg %p212
        %s421 = smul.u32 16, %s22
        %p422 = scmp.lt.s32.totalorder %s421, 31
        %s423 = scalar_select %p422, %s421, 31
        %s424 = smul.addr %s423, 8
        %s425 = scalar_lea.vmem %s7, %s424
        %s426 = smul.u32 16, %s22
        %s427 = smul.u32 16, %s23
        %p428 = scmp.lt.s32.totalorder %s427, 31
        %s429 = scalar_select %p428, %s427, 31
        %s430 = smul.addr %s429, 4
        %s431 = scalar_lea.vmem %s1, %s430
        %s432 = smul.u32 16, %s23
        %s433 = smul.u32 16, %s22
        %p434 = scmp.lt.s32.totalorder %s433, 31
        %s435 = scalar_select %p434, %s433, 31
        %s436 = smul.addr %s435, 8
        %s437 = scalar_lea.vmem %s2, %s436
        %s438 = smul.u32 16, %s22
        %s439 = smul.u32 16, %s22
        %p440 = scmp.lt.s32.totalorder %s439, 31
        %s441 = scalar_select %p440, %s439, 31
        %s442 = smul.addr %s441, 8
        %s443 = scalar_lea.vmem %s7, %s442
        %s444 = smul.u32 16, %s22
        %p445 = scmp.eq.s32.totalorder %s23, 0
        // Predicated region
        $region90: #{gin_net_forward.2} parent=84 // pred_check
          %p446 = pneg %p445
        $region91: #{gin_net_forward.2} parent=84 // pred_check_branch
          %448 = sbr.rel (%p446) target = $region93
        $region92: #{gin_net_forward.2} parent=84 // pred_region
          %449 = vst [vmem:[#allocation2] sm:$0xff] 0.0
          %450 = vst [vmem:[#allocation2 + $0x8] sm:$0xff] 0.0
          %451 = vst [vmem:[#allocation2 + $0x10] sm:$0xff] 0.0
          %452 = vst [vmem:[#allocation2 + $0x18] sm:$0xff] 0.0
          %453 = vst [vmem:[#allocation2 + $0x20] sm:$0xff] 0.0
          %454 = vst [vmem:[#allocation2 + $0x28] sm:$0xff] 0.0
          %455 = vst [vmem:[#allocation2 + $0x30] sm:$0xff] 0.0
          %456 = vst [vmem:[#allocation2 + $0x38] sm:$0xff] 0.0
          %457 = vst [vmem:[#allocation2 + $0x40] sm:$0xff] 0.0
          %458 = vst [vmem:[#allocation2 + $0x48] sm:$0xff] 0.0
          %459 = vst [vmem:[#allocation2 + $0x50] sm:$0xff] 0.0
          %460 = vst [vmem:[#allocation2 + $0x58] sm:$0xff] 0.0
          %461 = vst [vmem:[#allocation2 + $0x60] sm:$0xff] 0.0
          %462 = vst [vmem:[#allocation2 + $0x68] sm:$0xff] 0.0
          %463 = vst [vmem:[#allocation2 + $0x70] sm:$0xff] 0.0
          %464 = vst [vmem:[#allocation2 + $0x78] sm:$0xff] 0.0
        $region93: #{gin_net_forward.2} parent=84 // pred_fallthru
          _
        %v465 = vld [vmem:[#allocation2] sm:$0xff]
        %v466 = vld [vmem:[#allocation2 + $0x8] sm:$0xff]
        %v467 = vld [vmem:[#allocation2 + $0x10] sm:$0xff]
        %v468 = vld [vmem:[#allocation2 + $0x18] sm:$0xff]
        %v469 = vld [vmem:[#allocation2 + $0x20] sm:$0xff]
        %v470 = vld [vmem:[#allocation2 + $0x28] sm:$0xff]
        %v471 = vld [vmem:[#allocation2 + $0x30] sm:$0xff]
        %v472 = vld [vmem:[#allocation2 + $0x38] sm:$0xff]
        %v473 = vld [vmem:[#allocation2 + $0x40] sm:$0xff]
        %v474 = vld [vmem:[#allocation2 + $0x48] sm:$0xff]
        %v475 = vld [vmem:[#allocation2 + $0x50] sm:$0xff]
        %v476 = vld [vmem:[#allocation2 + $0x58] sm:$0xff]
        %v477 = vld [vmem:[#allocation2 + $0x60] sm:$0xff]
        %v478 = vld [vmem:[#allocation2 + $0x68] sm:$0xff]
        %v479 = vld [vmem:[#allocation2 + $0x70] sm:$0xff]
        %v480 = vld [vmem:[#allocation2 + $0x78] sm:$0xff]
        %v481 = vld [vmem:[%s387] sm:$0xf]
        %v482 = vld [vmem:[%s387 + $0x4] sm:$0xf]
        %v483 = vld [vmem:[%s387 + $0x8] sm:$0xf]
        %v484 = vld [vmem:[%s387 + $0xc] sm:$0xf]
        %v485 = vld [vmem:[%s387 + $0x10] sm:$0xf]
        %v486 = vld [vmem:[%s387 + $0x14] sm:$0xf]
        %v487 = vld [vmem:[%s387 + $0x18] sm:$0xf]
        %v488 = vld [vmem:[%s387 + $0x1c] sm:$0xf]
        %v489 = vld [vmem:[%s387 + $0x20] sm:$0xf]
        %v490 = vld [vmem:[%s387 + $0x24] sm:$0xf]
        %v491 = vld [vmem:[%s387 + $0x28] sm:$0xf]
        %v492 = vld [vmem:[%s387 + $0x2c] sm:$0xf]
        %v493 = vld [vmem:[%s387 + $0x30] sm:$0xf]
        %v494 = vld [vmem:[%s387 + $0x34] sm:$0xf]
        %v495 = vld [vmem:[%s387 + $0x38] sm:$0xf]
        %v496 = vld [vmem:[%s387 + $0x3c] sm:$0xf]
        %v497 = vld [vmem:[%s431] sm:$0xf]
        %v498 = vld [vmem:[%s431 + $0x4] sm:$0xf]
        %v499 = vld [vmem:[%s431 + $0x8] sm:$0xf]
        %v500 = vld [vmem:[%s431 + $0xc] sm:$0xf]
        %v501 = vld [vmem:[%s431 + $0x10] sm:$0xf]
        %v502 = vld [vmem:[%s431 + $0x14] sm:$0xf]
        %v503 = vld [vmem:[%s431 + $0x18] sm:$0xf]
        %v504 = vld [vmem:[%s431 + $0x1c] sm:$0xf]
        %v505 = vld [vmem:[%s431 + $0x20] sm:$0xf]
        %v506 = vld [vmem:[%s431 + $0x24] sm:$0xf]
        %v507 = vld [vmem:[%s431 + $0x28] sm:$0xf]
        %v508 = vld [vmem:[%s431 + $0x2c] sm:$0xf]
        %v509 = vld [vmem:[%s431 + $0x30] sm:$0xf]
        %v510 = vld [vmem:[%s431 + $0x34] sm:$0xf]
        %v511 = vld [vmem:[%s431 + $0x38] sm:$0xf]
        %v512 = vld [vmem:[%s431 + $0x3c] sm:$0xf]
        %v529 = vunpack.c.l.b16 %v481
        %v530 = vunpack.c.l.b16 %v482
        %v531 = vunpack.c.l.b16 %v483
        %v532 = vunpack.c.l.b16 %v484
        %v533 = vunpack.c.l.b16 %v485
        %v534 = vunpack.c.l.b16 %v486
        %v535 = vunpack.c.l.b16 %v487
        %v536 = vunpack.c.l.b16 %v488
        %v537 = vunpack.c.l.b16 %v489
        %v538 = vunpack.c.l.b16 %v490
        %v539 = vunpack.c.l.b16 %v491
        %v540 = vunpack.c.l.b16 %v492
        %v541 = vunpack.c.l.b16 %v493
        %v542 = vunpack.c.l.b16 %v494
        %v543 = vunpack.c.l.b16 %v495
        %v544 = vunpack.c.l.b16 %v496
        %v545 = vpack.c.b16 %v530, %v529
        %v546 = vpack.c.b16 %v532, %v531
        %v547 = vpack.c.b16 %v534, %v533
        %v548 = vpack.c.b16 %v536, %v535
        %v549 = vpack.c.b16 %v538, %v537
        %v550 = vpack.c.b16 %v540, %v539
        %v551 = vpack.c.b16 %v542, %v541
        %v552 = vpack.c.b16 %v544, %v543
        %v577 = vunpack.c.l.b16 %v497
        %v578 = vunpack.c.l.b16 %v498
        %v579 = vunpack.c.l.b16 %v499
        %v580 = vunpack.c.l.b16 %v500
        %v581 = vunpack.c.l.b16 %v501
        %v582 = vunpack.c.l.b16 %v502
        %v583 = vunpack.c.l.b16 %v503
        %v584 = vunpack.c.l.b16 %v504
        %v585 = vunpack.c.l.b16 %v505
        %v586 = vunpack.c.l.b16 %v506
        %v587 = vunpack.c.l.b16 %v507
        %v588 = vunpack.c.l.b16 %v508
        %v589 = vunpack.c.l.b16 %v509
        %v590 = vunpack.c.l.b16 %v510
        %v591 = vunpack.c.l.b16 %v511
        %v592 = vunpack.c.l.b16 %v512
        %v593 = vpack.c.b16 %v578, %v577
        %v594 = vpack.c.b16 %v580, %v579
        %v595 = vpack.c.b16 %v582, %v581
        %v596 = vpack.c.b16 %v584, %v583
        %v597 = vpack.c.b16 %v586, %v585
        %v598 = vpack.c.b16 %v588, %v587
        %v599 = vpack.c.b16 %v590, %v589
        %v600 = vpack.c.b16 %v592, %v591
        %609 = vmatpush.bf16.msra.mxu0 %v600
        %610 = vmatpush.bf16.msra.mxu0 %v599
        %611 = vmatpush.bf16.msra.mxu0 %v598
        %612 = vmatpush.bf16.msra.mxu0 %v597
        %613 = vmatpush.bf16.msra.mxu0 %v596
        %614 = vmatpush.bf16.msra.mxu0 %v595
        %615 = vmatpush.bf16.msra.mxu0 %v594
        %616 = vmatpush.bf16.msra.mxu0 %v593
        %617 = vmatmul.bf16.gmra.mxu0 %v545
        %v618 = vpop.f32.mrf.mxu0
        %v619 = vadd.f32 0.0, %v618
        %v620 = vpop.f32.mrf.mxu0
        %v621 = vadd.f32 0.0, %v620
        %622 = vmatmul.bf16.gmra.mxu0 %v546
        %v623 = vpop.f32.mrf.mxu0
        %v624 = vadd.f32 0.0, %v623
        %v625 = vpop.f32.mrf.mxu0
        %v626 = vadd.f32 0.0, %v625
        %627 = vmatmul.bf16.gmra.mxu0 %v547
        %v628 = vpop.f32.mrf.mxu0
        %v629 = vadd.f32 0.0, %v628
        %v630 = vpop.f32.mrf.mxu0
        %v631 = vadd.f32 0.0, %v630
        %632 = vmatmul.bf16.gmra.mxu0 %v548
        %v633 = vpop.f32.mrf.mxu0
        %v634 = vadd.f32 0.0, %v633
        %v635 = vpop.f32.mrf.mxu0
        %v636 = vadd.f32 0.0, %v635
        %637 = vmatmul.bf16.gmra.mxu0 %v549
        %v638 = vpop.f32.mrf.mxu0
        %v639 = vadd.f32 0.0, %v638
        %v640 = vpop.f32.mrf.mxu0
        %v641 = vadd.f32 0.0, %v640
        %642 = vmatmul.bf16.gmra.mxu0 %v550
        %v643 = vpop.f32.mrf.mxu0
        %v644 = vadd.f32 0.0, %v643
        %v645 = vpop.f32.mrf.mxu0
        %v646 = vadd.f32 0.0, %v645
        %647 = vmatmul.bf16.gmra.mxu0 %v551
        %v648 = vpop.f32.mrf.mxu0
        %v649 = vadd.f32 0.0, %v648
        %v650 = vpop.f32.mrf.mxu0
        %v651 = vadd.f32 0.0, %v650
        %652 = vmatmul.bf16.gmra.mxu0 %v552
        %v653 = vpop.f32.mrf.mxu0
        %v654 = vadd.f32 0.0, %v653
        %v655 = vpop.f32.mrf.mxu0
        %v656 = vadd.f32 0.0, %v655
        %657 = vdwg.mxu0
        %v658 = vadd.f32 %v465, %v619
        %v659 = vadd.f32 %v466, %v621
        %v660 = vadd.f32 %v467, %v624
        %v661 = vadd.f32 %v468, %v626
        %v662 = vadd.f32 %v469, %v629
        %v663 = vadd.f32 %v470, %v631
        %v664 = vadd.f32 %v471, %v634
        %v665 = vadd.f32 %v472, %v636
        %v666 = vadd.f32 %v473, %v639
        %v667 = vadd.f32 %v474, %v641
        %v668 = vadd.f32 %v475, %v644
        %v669 = vadd.f32 %v476, %v646
        %v670 = vadd.f32 %v477, %v649
        %v671 = vadd.f32 %v478, %v651
        %v672 = vadd.f32 %v479, %v654
        %v673 = vadd.f32 %v480, %v656
        %674 = vst [vmem:[#allocation2] sm:$0xff] %v658
        %675 = vst [vmem:[#allocation2 + $0x8] sm:$0xff] %v659
        %676 = vst [vmem:[#allocation2 + $0x10] sm:$0xff] %v660
        %677 = vst [vmem:[#allocation2 + $0x18] sm:$0xff] %v661
        %678 = vst [vmem:[#allocation2 + $0x20] sm:$0xff] %v662
        %679 = vst [vmem:[#allocation2 + $0x28] sm:$0xff] %v663
        %680 = vst [vmem:[#allocation2 + $0x30] sm:$0xff] %v664
        %681 = vst [vmem:[#allocation2 + $0x38] sm:$0xff] %v665
        %682 = vst [vmem:[#allocation2 + $0x40] sm:$0xff] %v666
        %683 = vst [vmem:[#allocation2 + $0x48] sm:$0xff] %v667
        %684 = vst [vmem:[#allocation2 + $0x50] sm:$0xff] %v668
        %685 = vst [vmem:[#allocation2 + $0x58] sm:$0xff] %v669
        %686 = vst [vmem:[#allocation2 + $0x60] sm:$0xff] %v670
        %687 = vst [vmem:[#allocation2 + $0x68] sm:$0xff] %v671
        %688 = vst [vmem:[#allocation2 + $0x70] sm:$0xff] %v672
        %689 = vst [vmem:[#allocation2 + $0x78] sm:$0xff] %v673
        %p690 = scmp.eq.s32.totalorder %s23, 1
        // Predicated region
        $region94: #{gin_net_forward.2} parent=84 // pred_check
          %p691 = pneg %p690
        $region95: #{gin_net_forward.2} parent=84 // pred_check_branch
          %693 = sbr.rel (%p691) target = $region97
        $region96: #{gin_net_forward.2} parent=84 // pred_region
          %v694 = vld [vmem:[%s437] sm:$0xff]
          %v695 = vld [vmem:[%s437 + $0x8] sm:$0xff]
          %v696 = vld [vmem:[%s437 + $0x10] sm:$0xff]
          %v697 = vld [vmem:[%s437 + $0x18] sm:$0xff]
          %v698 = vld [vmem:[%s437 + $0x20] sm:$0xff]
          %v699 = vld [vmem:[%s437 + $0x28] sm:$0xff]
          %v700 = vld [vmem:[%s437 + $0x30] sm:$0xff]
          %v701 = vld [vmem:[%s437 + $0x38] sm:$0xff]
          %v702 = vld [vmem:[%s437 + $0x40] sm:$0xff]
          %v703 = vld [vmem:[%s437 + $0x48] sm:$0xff]
          %v704 = vld [vmem:[%s437 + $0x50] sm:$0xff]
          %v705 = vld [vmem:[%s437 + $0x58] sm:$0xff]
          %v706 = vld [vmem:[%s437 + $0x60] sm:$0xff]
          %v707 = vld [vmem:[%s437 + $0x68] sm:$0xff]
          %v708 = vld [vmem:[%s437 + $0x70] sm:$0xff]
          %v709 = vld [vmem:[%s437 + $0x78] sm:$0xff]
          %v710 = vld [vmem:[#allocation2] sm:$0xff]
          %v711 = vld [vmem:[#allocation2 + $0x8] sm:$0xff]
          %v712 = vld [vmem:[#allocation2 + $0x10] sm:$0xff]
          %v713 = vld [vmem:[#allocation2 + $0x18] sm:$0xff]
          %v714 = vld [vmem:[#allocation2 + $0x20] sm:$0xff]
          %v715 = vld [vmem:[#allocation2 + $0x28] sm:$0xff]
          %v716 = vld [vmem:[#allocation2 + $0x30] sm:$0xff]
          %v717 = vld [vmem:[#allocation2 + $0x38] sm:$0xff]
          %v718 = vld [vmem:[#allocation2 + $0x40] sm:$0xff]
          %v719 = vld [vmem:[#allocation2 + $0x48] sm:$0xff]
          %v720 = vld [vmem:[#allocation2 + $0x50] sm:$0xff]
          %v721 = vld [vmem:[#allocation2 + $0x58] sm:$0xff]
          %v722 = vld [vmem:[#allocation2 + $0x60] sm:$0xff]
          %v723 = vld [vmem:[#allocation2 + $0x68] sm:$0xff]
          %v724 = vld [vmem:[#allocation2 + $0x70] sm:$0xff]
          %v725 = vld [vmem:[#allocation2 + $0x78] sm:$0xff]
          %v726 = vadd.f32 %v694, %v710
          %v727 = vadd.f32 %v695, %v711
          %v728 = vadd.f32 %v696, %v712
          %v729 = vadd.f32 %v697, %v713
          %v730 = vadd.f32 %v698, %v714
          %v731 = vadd.f32 %v699, %v715
          %v732 = vadd.f32 %v700, %v716
          %v733 = vadd.f32 %v701, %v717
          %v734 = vadd.f32 %v702, %v718
          %v735 = vadd.f32 %v703, %v719
          %v736 = vadd.f32 %v704, %v720
          %v737 = vadd.f32 %v705, %v721
          %v738 = vadd.f32 %v706, %v722
          %v739 = vadd.f32 %v707, %v723
          %v740 = vadd.f32 %v708, %v724
          %v741 = vadd.f32 %v709, %v725
          %v742 = vld [vmem:[%s3] sm:$0xff]
          %v743 = vld [vmem:[%s3 + $0x8] sm:$0xff]
          %v744 = vld [vmem:[%s3 + $0x10] sm:$0xff]
          %v745 = vld [vmem:[%s3 + $0x18] sm:$0xff]
          %v746 = vld [vmem:[%s3 + $0x20] sm:$0xff]
          %v747 = vld [vmem:[%s3 + $0x28] sm:$0xff]
          %v748 = vld [vmem:[%s3 + $0x30] sm:$0xff]
          %v749 = vld [vmem:[%s3 + $0x38] sm:$0xff]
          %v750 = vld [vmem:[%s3 + $0x40] sm:$0xff]
          %v751 = vld [vmem:[%s3 + $0x48] sm:$0xff]
          %v752 = vld [vmem:[%s3 + $0x50] sm:$0xff]
          %v753 = vld [vmem:[%s3 + $0x58] sm:$0xff]
          %v754 = vld [vmem:[%s3 + $0x60] sm:$0xff]
          %v755 = vld [vmem:[%s3 + $0x68] sm:$0xff]
          %v756 = vld [vmem:[%s3 + $0x70] sm:$0xff]
          %v757 = vld [vmem:[%s3 + $0x78] sm:$0xff]
          %v758 = vld [vmem:[%s4] sm:$0x1]
          %v760 = vperm.slane %v758, 0
          %762 = vmatpush.msra.mxu0 %v757
          %763 = vmatpush.msra.mxu0 %v756
          %764 = vmatpush.msra.mxu0 %v755
          %765 = vmatpush.msra.mxu0 %v754
          %766 = vmatpush.msra.mxu0 %v753
          %767 = vmatpush.msra.mxu0 %v752
          %768 = vmatpush.msra.mxu0 %v751
          %769 = vmatpush.msra.mxu0 %v750
          %770 = vmatpush.msra.mxu0 %v749
          %771 = vmatpush.msra.mxu0 %v748
          %772 = vmatpush.msra.mxu0 %v747
          %773 = vmatpush.msra.mxu0 %v746
          %774 = vmatpush.msra.mxu0 %v745
          %775 = vmatpush.msra.mxu0 %v744
          %776 = vmatpush.msra.mxu0 %v743
          %777 = vmatpush.msra.mxu0 %v742
          %778 = vmatmul.f32.gmra.mxu0 %v726
          %v779 = vpop.f32.mrf.mxu0
          %v780 = vadd.f32 %v760, %v779
          %781 = vmatmul.f32.gmra.mxu0 %v727
          %v782 = vpop.f32.mrf.mxu0
          %v783 = vadd.f32 %v760, %v782
          %784 = vmatmul.f32.gmra.mxu0 %v728
          %v785 = vpop.f32.mrf.mxu0
          %v786 = vadd.f32 %v760, %v785
          %787 = vmatmul.f32.gmra.mxu0 %v729
          %v788 = vpop.f32.mrf.mxu0
          %v789 = vadd.f32 %v760, %v788
          %790 = vmatmul.f32.gmra.mxu0 %v730
          %v791 = vpop.f32.mrf.mxu0
          %v792 = vadd.f32 %v760, %v791
          %793 = vmatmul.f32.gmra.mxu0 %v731
          %v794 = vpop.f32.mrf.mxu0
          %v795 = vadd.f32 %v760, %v794
          %796 = vmatmul.f32.gmra.mxu0 %v732
          %v797 = vpop.f32.mrf.mxu0
          %v798 = vadd.f32 %v760, %v797
          %799 = vmatmul.f32.gmra.mxu0 %v733
          %v800 = vpop.f32.mrf.mxu0
          %v801 = vadd.f32 %v760, %v800
          %802 = vmatmul.f32.gmra.mxu0 %v734
          %v803 = vpop.f32.mrf.mxu0
          %v804 = vadd.f32 %v760, %v803
          %805 = vmatmul.f32.gmra.mxu0 %v735
          %v806 = vpop.f32.mrf.mxu0
          %v807 = vadd.f32 %v760, %v806
          %808 = vmatmul.f32.gmra.mxu0 %v736
          %v809 = vpop.f32.mrf.mxu0
          %v810 = vadd.f32 %v760, %v809
          %811 = vmatmul.f32.gmra.mxu0 %v737
          %v812 = vpop.f32.mrf.mxu0
          %v813 = vadd.f32 %v760, %v812
          %814 = vmatmul.f32.gmra.mxu0 %v738
          %v815 = vpop.f32.mrf.mxu0
          %v816 = vadd.f32 %v760, %v815
          %817 = vmatmul.f32.gmra.mxu0 %v739
          %v818 = vpop.f32.mrf.mxu0
          %v819 = vadd.f32 %v760, %v818
          %820 = vmatmul.f32.gmra.mxu0 %v740
          %v821 = vpop.f32.mrf.mxu0
          %v822 = vadd.f32 %v760, %v821
          %823 = vmatmul.f32.gmra.mxu0 %v741
          %v824 = vpop.f32.mrf.mxu0
          %v825 = vadd.f32 %v760, %v824
          %826 = vdwg.mxu0
          %v827 = vmax.f32 %v780, 0.0
          %v828 = vmax.f32 %v783, 0.0
          %v829 = vmax.f32 %v786, 0.0
          %v830 = vmax.f32 %v789, 0.0
          %v831 = vmax.f32 %v792, 0.0
          %v832 = vmax.f32 %v795, 0.0
          %v833 = vmax.f32 %v798, 0.0
          %v834 = vmax.f32 %v801, 0.0
          %v835 = vmax.f32 %v804, 0.0
          %v836 = vmax.f32 %v807, 0.0
          %v837 = vmax.f32 %v810, 0.0
          %v838 = vmax.f32 %v813, 0.0
          %v839 = vmax.f32 %v816, 0.0
          %v840 = vmax.f32 %v819, 0.0
          %v841 = vmax.f32 %v822, 0.0
          %v842 = vmax.f32 %v825, 0.0
          %v843 = vld [vmem:[%s5] sm:$0xff]
          %v844 = vld [vmem:[%s5 + $0x8] sm:$0xff]
          %v845 = vld [vmem:[%s5 + $0x10] sm:$0xff]
          %v846 = vld [vmem:[%s5 + $0x18] sm:$0xff]
          %v847 = vld [vmem:[%s5 + $0x20] sm:$0xff]
          %v848 = vld [vmem:[%s5 + $0x28] sm:$0xff]
          %v849 = vld [vmem:[%s5 + $0x30] sm:$0xff]
          %v850 = vld [vmem:[%s5 + $0x38] sm:$0xff]
          %v851 = vld [vmem:[%s5 + $0x40] sm:$0xff]
          %v852 = vld [vmem:[%s5 + $0x48] sm:$0xff]
          %v853 = vld [vmem:[%s5 + $0x50] sm:$0xff]
          %v854 = vld [vmem:[%s5 + $0x58] sm:$0xff]
          %v855 = vld [vmem:[%s5 + $0x60] sm:$0xff]
          %v856 = vld [vmem:[%s5 + $0x68] sm:$0xff]
          %v857 = vld [vmem:[%s5 + $0x70] sm:$0xff]
          %v858 = vld [vmem:[%s5 + $0x78] sm:$0xff]
          %v859 = vld [vmem:[%s6] sm:$0x1]
          %v861 = vperm.slane %v859, 0
          %863 = vmatpush.msra.mxu0 %v858
          %864 = vmatpush.msra.mxu0 %v857
          %865 = vmatpush.msra.mxu0 %v856
          %866 = vmatpush.msra.mxu0 %v855
          %867 = vmatpush.msra.mxu0 %v854
          %868 = vmatpush.msra.mxu0 %v853
          %869 = vmatpush.msra.mxu0 %v852
          %870 = vmatpush.msra.mxu0 %v851
          %871 = vmatpush.msra.mxu0 %v850
          %872 = vmatpush.msra.mxu0 %v849
          %873 = vmatpush.msra.mxu0 %v848
          %874 = vmatpush.msra.mxu0 %v847
          %875 = vmatpush.msra.mxu0 %v846
          %876 = vmatpush.msra.mxu0 %v845
          %877 = vmatpush.msra.mxu0 %v844
          %878 = vmatpush.msra.mxu0 %v843
          %879 = vmatmul.f32.gmra.mxu0 %v827
          %v880 = vpop.f32.mrf.mxu0
          %v881 = vadd.f32 %v861, %v880
          %882 = vmatmul.f32.gmra.mxu0 %v828
          %v883 = vpop.f32.mrf.mxu0
          %v884 = vadd.f32 %v861, %v883
          %885 = vmatmul.f32.gmra.mxu0 %v829
          %v886 = vpop.f32.mrf.mxu0
          %v887 = vadd.f32 %v861, %v886
          %888 = vmatmul.f32.gmra.mxu0 %v830
          %v889 = vpop.f32.mrf.mxu0
          %v890 = vadd.f32 %v861, %v889
          %891 = vmatmul.f32.gmra.mxu0 %v831
          %v892 = vpop.f32.mrf.mxu0
          %v893 = vadd.f32 %v861, %v892
          %894 = vmatmul.f32.gmra.mxu0 %v832
          %v895 = vpop.f32.mrf.mxu0
          %v896 = vadd.f32 %v861, %v895
          %897 = vmatmul.f32.gmra.mxu0 %v833
          %v898 = vpop.f32.mrf.mxu0
          %v899 = vadd.f32 %v861, %v898
          %900 = vmatmul.f32.gmra.mxu0 %v834
          %v901 = vpop.f32.mrf.mxu0
          %v902 = vadd.f32 %v861, %v901
          %903 = vmatmul.f32.gmra.mxu0 %v835
          %v904 = vpop.f32.mrf.mxu0
          %v905 = vadd.f32 %v861, %v904
          %906 = vmatmul.f32.gmra.mxu0 %v836
          %v907 = vpop.f32.mrf.mxu0
          %v908 = vadd.f32 %v861, %v907
          %909 = vmatmul.f32.gmra.mxu0 %v837
          %v910 = vpop.f32.mrf.mxu0
          %v911 = vadd.f32 %v861, %v910
          %912 = vmatmul.f32.gmra.mxu0 %v838
          %v913 = vpop.f32.mrf.mxu0
          %v914 = vadd.f32 %v861, %v913
          %915 = vmatmul.f32.gmra.mxu0 %v839
          %v916 = vpop.f32.mrf.mxu0
          %v917 = vadd.f32 %v861, %v916
          %918 = vmatmul.f32.gmra.mxu0 %v840
          %v919 = vpop.f32.mrf.mxu0
          %v920 = vadd.f32 %v861, %v919
          %921 = vmatmul.f32.gmra.mxu0 %v841
          %v922 = vpop.f32.mrf.mxu0
          %v923 = vadd.f32 %v861, %v922
          %924 = vmatmul.f32.gmra.mxu0 %v842
          %v925 = vpop.f32.mrf.mxu0
          %v926 = vadd.f32 %v861, %v925
          %927 = vdwg.mxu0
          %v928 = vmax.f32 %v881, 0.0
          %v929 = vmax.f32 %v884, 0.0
          %v930 = vmax.f32 %v887, 0.0
          %v931 = vmax.f32 %v890, 0.0
          %v932 = vmax.f32 %v893, 0.0
          %v933 = vmax.f32 %v896, 0.0
          %v934 = vmax.f32 %v899, 0.0
          %v935 = vmax.f32 %v902, 0.0
          %v936 = vmax.f32 %v905, 0.0
          %v937 = vmax.f32 %v908, 0.0
          %v938 = vmax.f32 %v911, 0.0
          %v939 = vmax.f32 %v914, 0.0
          %v940 = vmax.f32 %v917, 0.0
          %v941 = vmax.f32 %v920, 0.0
          %v942 = vmax.f32 %v923, 0.0
          %v943 = vmax.f32 %v926, 0.0
          %944 = vst [vmem:[%s443] sm:$0xff] %v928
          %945 = vst [vmem:[%s443 + $0x8] sm:$0xff] %v929
          %946 = vst [vmem:[%s443 + $0x10] sm:$0xff] %v930
          %947 = vst [vmem:[%s443 + $0x18] sm:$0xff] %v931
          %948 = vst [vmem:[%s443 + $0x20] sm:$0xff] %v932
          %949 = vst [vmem:[%s443 + $0x28] sm:$0xff] %v933
          %950 = vst [vmem:[%s443 + $0x30] sm:$0xff] %v934
          %951 = vst [vmem:[%s443 + $0x38] sm:$0xff] %v935
          %952 = vst [vmem:[%s443 + $0x40] sm:$0xff] %v936
          %953 = vst [vmem:[%s443 + $0x48] sm:$0xff] %v937
          %954 = vst [vmem:[%s443 + $0x50] sm:$0xff] %v938
          %955 = vst [vmem:[%s443 + $0x58] sm:$0xff] %v939
          %956 = vst [vmem:[%s443 + $0x60] sm:$0xff] %v940
          %957 = vst [vmem:[%s443 + $0x68] sm:$0xff] %v941
          %958 = vst [vmem:[%s443 + $0x70] sm:$0xff] %v942
          %959 = vst [vmem:[%s443 + $0x78] sm:$0xff] %v943
        $region97: #{gin_net_forward.2} parent=84 // pred_fallthru
          _
        %s960 = smul.u32 16, %s22
        %p961 = scmp.lt.s32.totalorder %s960, 31
        %s962 = scalar_select %p961, %s960, 31
        %s963 = smul.addr %s962, 8
        %s964 = scalar_lea.vmem %s7, %s963
        // Predicated region
        $region98: #{gin_net_forward.2} parent=84 // pred_check
          %p965 = pneg %p212
        $region99: #{gin_net_forward.2} parent=84 // pred_check_branch
          %967 = sbr.rel (%p965) target = $region101
        $region100: #{gin_net_forward.2} parent=84 // pred_region
          %s968 = smul.u32 16, %s22
        $region101: #{gin_net_forward.2} parent=84 // pred_fallthru
          _
      $region85: #{gin_net_forward.2} parent=5 // pred_fallthru
        _
      %p969 = scmp.le.s32.totalorder 2, %s13
      // Predicated region
      $region102: #{gin_net_forward.2} parent=5 // pred_check
        %p970 = pneg %p969
      $region103: #{gin_net_forward.2} parent=5 // pred_check_branch
        %972 = sbr.rel (%p970) target = $region105
      $region104: #{gin_net_forward.2} parent=5 // pred_region
        %s973 = ssub.s32 %s13, 2
        // Predicated region
        $region106: #{gin_net_forward.2} parent=104 // pred_check
          %p974 = pneg %p218
        $region107: #{gin_net_forward.2} parent=104 // pred_check_branch
          %976 = sbr.rel (%p974) target = $region109
        $region108: #{gin_net_forward.2} parent=104 // pred_region
          %s977 = smul.u32 16, %s24
          %p978 = scmp.lt.s32.totalorder %s977, 31
          %s979 = scalar_select %p978, %s977, 31
          %s980 = smul.addr %s979, 8
          %s981 = scalar_lea.vmem %s7, %s980
        $region109: #{gin_net_forward.2} parent=104 // pred_fallthru
          _
      $region105: #{gin_net_forward.2} parent=5 // pred_fallthru
        _
    $region6: #{gin_net_forward.2} parent=1 // loop_footer
      %s17 = sadd.s32 1, %s13
    $region7: #{gin_net_forward.2} parent=1 // loop_footer_branch
      %12 = sbr.rel target = $region3
    $region8: #{gin_net_forward.2} parent=1 // loop_exit
      _

// kernel: gin_net_forward.3
$region0: #{gin_net_forward.3}
  #allocation0 [shape = 'u32[]', space=smem, size = 0x4, offset = 0x4, fixed_abs, tag = 'smem constant byte address 0x4 - core index']
  #allocation1 [shape = 'u32[72,128]{1,0:T(1,128)}', space=vmem, size = 0x9000, scoped, tag = 'internal scratch']
  #allocation2 [shape = 'f32[128,128]{1,0:T(8,128)}', space=vmem, size = 0x10000, scoped, tag = 'scratch operand']
  %s0 = inlined_call_operand.vmem [shape: bf16[256,256], index: 0, kind: input, shape index: {}]
  %s1 = inlined_call_operand.vmem [shape: bf16[256,128], index: 1, kind: input, shape index: {}]
  %s2 = inlined_call_operand.vmem [shape: f32[256,128], index: 2, kind: input, shape index: {}]
  %s3 = inlined_call_operand.vmem [shape: f32[128,128], index: 3, kind: input, shape index: {}]
  %s4 = inlined_call_operand.vmem [shape: f32[1,128], index: 4, kind: input, shape index: {}]
  %s5 = inlined_call_operand.vmem [shape: f32[256,128], index: 5, kind: output, shape index: {}]
  %s6 = sld [smem:[#allocation0]]
  $region102: #{gin_net_forward.3} parent=0
    _
  %s8 = ssub.s32 1, %s6
  %s9 = scalar_select 0, %s8, %s6
  $region1: #{gin_net_forward.3} parent=0
    #allocation3 [shape = 'u8[65536]{0}', space=vmem, size = 0x10000, scoped, tag = 'input window, operand 0']
    loop: start=0, step=1, limit=6
    $region2: #{gin_net_forward.3} parent=1 // loop_pre_header
      _
    $region3: #{gin_net_forward.3} parent=1 // loop_header
      %s11 = sphi 0, %s15
      %p12 = scmp.ge.s32.totalorder %s11, 6
      %s18 = sphi 0, %s30
      %s19 = sphi 0, %s26
      %s20 = sphi 0, %s18
      %s21 = sphi 0, %s19
      %s22 = sphi 0, %s20
      %s23 = sphi 0, %s21
      %s35 = sphi 0, %s37
      %s38 = sphi 0, %s35
      %s39 = sphi 0, %s38
      %s55 = sphi 0, %s39
      %s61 = sphi 0, %s63
      %s64 = sphi 0, %s61
      %s65 = sphi 0, %s64
      %s81 = sphi 0, %s65
      %s87 = sphi 0, %s89
      %s90 = sphi 0, %s87
      %s91 = sphi 0, %s90
      %s107 = sphi 0, %s91
      %s111 = sphi 0, %s111
      %s113 = sphi 0, %s111
      %s114 = sphi 0, %s113
      %s128 = sphi 0, %s114
      %s132 = sphi 0, %s132
      %s134 = sphi 0, %s132
      %s135 = sphi 0, %s134
      %s149 = sphi 0, %s135
      %s155 = sphi 0, %s157
      %s158 = sphi 0, %s155
      %s159 = sphi 0, %s158
      %s175 = sphi 0, %s159
    $region4: #{gin_net_forward.3} parent=1 // loop_header_branch
      %14 = sbr.rel (%p12) target = $region8
    $region5: #{gin_net_forward.3} parent=1 // loop_body
      %s16 = ssub.s32 %s11, 1
      %s17 = ssub.s32 %s11, 2
      %s24 = sadd.s32 1, %s19
      %p25 = scmp.ge.s32.totalorder %s24, 2
      %s26 = scalar_select %p25, 0, %s24
      %s27 = sadd.s32 1, %s18
      %s28 = scalar_select %p25, %s27, %s18
      %p29 = scmp.ge.s32.totalorder %s28, 2
      %s30 = scalar_select %p29, 0, %s28
      %s31 = ssub.s32 %s18, %s30
      %s32 = ssub.s32 %s19, %s26
      %s33 = sor.u32 %s31, %s32
      %p34 = scmp.eq.s32.totalorder %s33, 0
      %s36 = sadd.s32 %s35, 1
      %s37 = scalar_select %p34, %s35, %s36
      %p40 = pneg %p34
      %p41 = scmp.eq.s32.totalorder %s11, 3
      %p42 = por %p40, %p41
      %p43 = scmp.ne.s32.totalorder %s35, %s38
      %p44 = scmp.eq.s32.totalorder %s11, 0
      %p45 = por %p43, %p44
      %p46 = scmp.ne.s32.totalorder %s35, %s38
      %p47 = scmp.eq.s32.totalorder %s16, 3
      %p48 = por %p46, %p47
      %p49 = scmp.ne.s32.totalorder %s38, %s39
      %p50 = scmp.eq.s32.totalorder %s16, 0
      %p51 = por %p49, %p50
      %p52 = scmp.ne.s32.totalorder %s38, %s39
      %p53 = scmp.eq.s32.totalorder %s17, 3
      %p54 = por %p52, %p53
      %p56 = scmp.ne.s32.totalorder %s39, %s55
      %p57 = scmp.eq.s32.totalorder %s17, 0
      %p58 = por %p56, %p57
      %s59 = ssub.s32 %s19, %s26
      %p60 = scmp.eq.s32.totalorder %s59, 0
      %s62 = sadd.s32 %s61, 1
      %s63 = scalar_select %p60, %s61, %s62
      %p66 = pneg %p60
      %p67 = scmp.eq.s32.totalorder %s11, 3
      %p68 = por %p66, %p67
      %p69 = scmp.ne.s32.totalorder %s61, %s64
      %p70 = scmp.eq.s32.totalorder %s11, 0
      %p71 = por %p69, %p70
      %p72 = scmp.ne.s32.totalorder %s61, %s64
      %p73 = scmp.eq.s32.totalorder %s16, 3
      %p74 = por %p72, %p73
      %p75 = scmp.ne.s32.totalorder %s64, %s65
      %p76 = scmp.eq.s32.totalorder %s16, 0
      %p77 = por %p75, %p76
      %p78 = scmp.ne.s32.totalorder %s64, %s65
      %p79 = scmp.eq.s32.totalorder %s17, 3
      %p80 = por %p78, %p79
      %p82 = scmp.ne.s32.totalorder %s65, %s81
      %p83 = scmp.eq.s32.totalorder %s17, 0
      %p84 = por %p82, %p83
      %s85 = ssub.s32 %s18, %s30
      %p86 = scmp.eq.s32.totalorder %s85, 0
      %s88 = sadd.s32 %s87, 1
      %s89 = scalar_select %p86, %s87, %s88
      %p92 = pneg %p86
      %p93 = scmp.eq.s32.totalorder %s11, 3
      %p94 = por %p92, %p93
      %p95 = scmp.ne.s32.totalorder %s87, %s90
      %p96 = scmp.eq.s32.totalorder %s11, 0
      %p97 = por %p95, %p96
      %p98 = scmp.ne.s32.totalorder %s87, %s90
      %p99 = scmp.eq.s32.totalorder %s16, 3
      %p100 = por %p98, %p99
      %p101 = scmp.ne.s32.totalorder %s90, %s91
      %p102 = scmp.eq.s32.totalorder %s16, 0
      %p103 = por %p101, %p102
      %p104 = scmp.ne.s32.totalorder %s90, %s91
      %p105 = scmp.eq.s32.totalorder %s17, 3
      %p106 = por %p104, %p105
      %p108 = scmp.ne.s32.totalorder %s91, %s107
      %p109 = scmp.eq.s32.totalorder %s17, 0
      %p110 = por %p108, %p109
      %s112 = sadd.s32 %s111, 1
      %p115 = scmp.eq.s32.totalorder %s11, 3
      %p116 = scmp.ne.s32.totalorder %s111, %s113
      %p117 = scmp.eq.s32.totalorder %s11, 0
      %p118 = por %p116, %p117
      %p119 = scmp.ne.s32.totalorder %s111, %s113
      %p120 = scmp.eq.s32.totalorder %s16, 3
      %p121 = por %p119, %p120
      %p122 = scmp.ne.s32.totalorder %s113, %s114
      %p123 = scmp.eq.s32.totalorder %s16, 0
      %p124 = por %p122, %p123
      %p125 = scmp.ne.s32.totalorder %s113, %s114
      %p126 = scmp.eq.s32.totalorder %s17, 3
      %p127 = por %p125, %p126
      %p129 = scmp.ne.s32.totalorder %s114, %s128
      %p130 = scmp.eq.s32.totalorder %s17, 0
      %p131 = por %p129, %p130
      %s133 = sadd.s32 %s132, 1
      %p136 = scmp.eq.s32.totalorder %s11, 3
      %p137 = scmp.ne.s32.totalorder %s132, %s134
      %p138 = scmp.eq.s32.totalorder %s11, 0
      %p139 = por %p137, %p138
      %p140 = scmp.ne.s32.totalorder %s132, %s134
      %p141 = scmp.eq.s32.totalorder %s16, 3
      %p142 = por %p140, %p141
      %p143 = scmp.ne.s32.totalorder %s134, %s135
      %p144 = scmp.eq.s32.totalorder %s16, 0
      %p145 = por %p143, %p144
      %p146 = scmp.ne.s32.totalorder %s134, %s135
      %p147 = scmp.eq.s32.totalorder %s17, 3
      %p148 = por %p146, %p147
      %p150 = scmp.ne.s32.totalorder %s135, %s149
      %p151 = scmp.eq.s32.totalorder %s17, 0
      %p152 = por %p150, %p151
      %s153 = ssub.s32 %s18, %s30
      %p154 = scmp.eq.s32.totalorder %s153, 0
      %s156 = sadd.s32 %s155, 1
      %s157 = scalar_select %p154, %s155, %s156
      %p160 = pneg %p154
      %p161 = scmp.eq.s32.totalorder %s11, 3
      %p162 = por %p160, %p161
      %p163 = scmp.ne.s32.totalorder %s155, %s158
      %p164 = scmp.eq.s32.totalorder %s11, 0
      %p165 = por %p163, %p164
      %p166 = scmp.ne.s32.totalorder %s155, %s158
      %p167 = scmp.eq.s32.totalorder %s16, 3
      %p168 = por %p166, %p167
      %p169 = scmp.ne.s32.totalorder %s158, %s159
      %p170 = scmp.eq.s32.totalorder %s16, 0
      %p171 = por %p169, %p170
      %p172 = scmp.ne.s32.totalorder %s158, %s159
      %p173 = scmp.eq.s32.totalorder %s17, 3
      %p174 = por %p172, %p173
      %p176 = scmp.ne.s32.totalorder %s159, %s175
      %p177 = scmp.eq.s32.totalorder %s17, 0
      %p178 = por %p176, %p177
      %p179 = scmp.le.s32.totalorder 1, %s11
      %p180 = scmp.lt.s32.totalorder %s11, 5
      %p181 = pnand %p179, %p180
      %p182 = pneg %p181
      // Predicated region
      $region9: #{gin_net_forward.3} parent=5 // pred_check
        _
      $region10: #{gin_net_forward.3} parent=5 // pred_check_branch
        %184 = sbr.rel (%p181) target = $region12
      $region11: #{gin_net_forward.3} parent=5 // pred_region
        %s185 = ssub.s32 %s11, 1
        // Predicated region
        $region13: #{gin_net_forward.3} parent=11 // pred_check
          %p186 = pneg %p124
        $region14: #{gin_net_forward.3} parent=11 // pred_check_branch
          %188 = sbr.rel (%p186) target = $region16
        $region15: #{gin_net_forward.3} parent=11 // pred_region
          _
        $region16: #{gin_net_forward.3} parent=11 // pred_fallthru
          _
        // Predicated region
        $region17: #{gin_net_forward.3} parent=11 // pred_check
          %p189 = pneg %p145
        $region18: #{gin_net_forward.3} parent=11 // pred_check_branch
          %191 = sbr.rel (%p189) target = $region20
        $region19: #{gin_net_forward.3} parent=11 // pred_region
          _
        $region20: #{gin_net_forward.3} parent=11 // pred_fallthru
          _
      $region12: #{gin_net_forward.3} parent=5 // pred_fallthru
        _
      %p192 = scmp.lt.s32.totalorder %s11, 4
      // Predicated region
      $region21: #{gin_net_forward.3} parent=5 // pred_check
        %p193 = pneg %p192
      $region22: #{gin_net_forward.3} parent=5 // pred_check_branch
        %195 = sbr.rel (%p193) target = $region24
      $region23: #{gin_net_forward.3} parent=5 // pred_region
        // Predicated region
        $region25: #{gin_net_forward.3} parent=23 // pred_check
          %p196 = pneg %p45
        $region26: #{gin_net_forward.3} parent=23 // pred_check_branch
          %198 = sbr.rel (%p196) target = $region28
        $region27: #{gin_net_forward.3} parent=23 // pred_region
          %s199 = sand.u32 %s35, 1
          %s200 = sand.u32 %s35, 1
          %s201 = smul.addr %s200, 64
          %s202 = scalar_lea.vmem [#allocation3], %s201
          %s203 = smul.u32 16, %s18
          %s204 = smul.addr %s203, 2
          %s205 = sadd.s32 %s19, %s204
          %s206 = smul.addr %s205, 4
          %s207 = scalar_lea.vmem %s0, %s206
          // Predicated region
          $region29: #{gin_net_forward.3} parent=27 // pred_check
            _
          $region30: #{gin_net_forward.3} parent=27 // pred_check_branch
            %209 = sbr.rel (0) target = $region32
          $region31: #{gin_net_forward.3} parent=27 // pred_region
            // Predicated region
            $region33: #{gin_net_forward.3} parent=31 // pred_check
              _
            $region34: #{gin_net_forward.3} parent=31 // pred_check_branch
              %211 = sbr.rel target = $region36
            $region35: #{gin_net_forward.3} parent=31 // pred_region
              // Predicated region
              $region48: #{gin_net_forward.3} parent=35 // pred_check
                _
              $region49: #{gin_net_forward.3} parent=35 // pred_check_branch
                %257 = sbr.rel (0) target = $region51
              $region50: #{gin_net_forward.3} parent=35 // pred_region
                loop: start=0, step=1, limit=1
                $region52: #{gin_net_forward.3} parent=50 // loop_pre_header
                  _
                $region53: #{gin_net_forward.3} parent=50 // loop_header
                  %s259 = sphi 0, %s263
                  %p260 = scmp.ge.s32.totalorder %s259, 1
                  %s264 = sphi %s207, %s207
                  %s265 = sphi %s202, %s202
                $region54: #{gin_net_forward.3} parent=50 // loop_header_branch
                  %262 = sbr.rel (%p260) target = $region58
                $region55: #{gin_net_forward.3} parent=50 // loop_body
                  _
                $region56: #{gin_net_forward.3} parent=50 // loop_footer
                  %s263 = sadd.s32 1, %s259
                $region57: #{gin_net_forward.3} parent=50 // loop_footer_branch
                  %258 = sbr.rel target = $region53
                $region58: #{gin_net_forward.3} parent=50 // loop_exit
                  _
                %s267 = ssub.s32 16, 1
                loop: start=0, step=1, limit=1
                $region59: #{gin_net_forward.3} parent=50 // loop_pre_header
                  _
                $region60: #{gin_net_forward.3} parent=50 // loop_header
                  %s269 = sphi 0, %s273
                  %p270 = scmp.ge.s32.totalorder %s269, 1
                  %s274 = sphi %s207, %s207
                  %s275 = sphi %s202, %s202
                $region61: #{gin_net_forward.3} parent=50 // loop_header_branch
                  %272 = sbr.rel (%p270) target = $region65
                $region62: #{gin_net_forward.3} parent=50 // loop_body
                  %v276 = vld [vmem:[%s274] sm:%s267]
                  %277 = vst [vmem:[%s275] sm:%s267] %v276
                  %v278 = vld [vmem:[%s274 + $0x8] sm:%s267]
                  %279 = vst [vmem:[%s275 + $0x4] sm:%s267] %v278
                  %v280 = vld [vmem:[%s274 + $0x10] sm:%s267]
                  %281 = vst [vmem:[%s275 + $0x8] sm:%s267] %v280
                  %v282 = vld [vmem:[%s274 + $0x18] sm:%s267]
                  %283 = vst [vmem:[%s275 + $0xc] sm:%s267] %v282
                  %v284 = vld [vmem:[%s274 + $0x20] sm:%s267]
                  %285 = vst [vmem:[%s275 + $0x10] sm:%s267] %v284
                  %v286 = vld [vmem:[%s274 + $0x28] sm:%s267]
                  %287 = vst [vmem:[%s275 + $0x14] sm:%s267] %v286
                  %v288 = vld [vmem:[%s274 + $0x30] sm:%s267]
                  %289 = vst [vmem:[%s275 + $0x18] sm:%s267] %v288
                  %v290 = vld [vmem:[%s274 + $0x38] sm:%s267]
                  %291 = vst [vmem:[%s275 + $0x1c] sm:%s267] %v290
                  %v292 = vld [vmem:[%s274 + $0x40] sm:%s267]
                  %293 = vst [vmem:[%s275 + $0x20] sm:%s267] %v292
                  %v294 = vld [vmem:[%s274 + $0x48] sm:%s267]
                  %295 = vst [vmem:[%s275 + $0x24] sm:%s267] %v294
                  %v296 = vld [vmem:[%s274 + $0x50] sm:%s267]
                  %297 = vst [vmem:[%s275 + $0x28] sm:%s267] %v296
                  %v298 = vld [vmem:[%s274 + $0x58] sm:%s267]
                  %299 = vst [vmem:[%s275 + $0x2c] sm:%s267] %v298
                  %v300 = vld [vmem:[%s274 + $0x60] sm:%s267]
                  %301 = vst [vmem:[%s275 + $0x30] sm:%s267] %v300
                  %v302 = vld [vmem:[%s274 + $0x68] sm:%s267]
                  %303 = vst [vmem:[%s275 + $0x34] sm:%s267] %v302
                  %v304 = vld [vmem:[%s274 + $0x70] sm:%s267]
                  %305 = vst [vmem:[%s275 + $0x38] sm:%s267] %v304
                  %v306 = vld [vmem:[%s274 + $0x78] sm:%s267]
                  %307 = vst [vmem:[%s275 + $0x3c] sm:%s267] %v306
                $region63: #{gin_net_forward.3} parent=50 // loop_footer
                  %s273 = sadd.s32 1, %s269
                $region64: #{gin_net_forward.3} parent=50 // loop_footer_branch
                  %268 = sbr.rel target = $region60
                $region65: #{gin_net_forward.3} parent=50 // loop_exit
                  _
              $region51: #{gin_net_forward.3} parent=35 // pred_fallthru
                _
            $region36: #{gin_net_forward.3} parent=31 // pred_fallthru
              _
            // Predicated region
            $region37: #{gin_net_forward.3} parent=31 // pred_check
              _
            $region38: #{gin_net_forward.3} parent=31 // pred_check_branch
              %213 = sbr.rel (0) target = $region40
            $region39: #{gin_net_forward.3} parent=31 // pred_region
              %s215 = ssub.s32 16, 1
              loop: start=0, step=1, limit=1
              $region41: #{gin_net_forward.3} parent=39 // loop_pre_header
                _
              $region42: #{gin_net_forward.3} parent=39 // loop_header
                %s217 = sphi 0, %s221
                %p218 = scmp.ge.s32.totalorder %s217, 1
                %s222 = sphi %s207, %s207
                %s223 = sphi %s202, %s202
              $region43: #{gin_net_forward.3} parent=39 // loop_header_branch
                %220 = sbr.rel (%p218) target = $region47
              $region44: #{gin_net_forward.3} parent=39 // loop_body
                %v224 = vld [vmem:[%s222] sm:%s215]
                %225 = vst [vmem:[%s223] sm:%s215] %v224
                %v226 = vld [vmem:[%s222 + $0x8] sm:%s215]
                %227 = vst [vmem:[%s223 + $0x4] sm:%s215] %v226
                %v228 = vld [vmem:[%s222 + $0x10] sm:%s215]
                %229 = vst [vmem:[%s223 + $0x8] sm:%s215] %v228
                %v230 = vld [vmem:[%s222 + $0x18] sm:%s215]
                %231 = vst [vmem:[%s223 + $0xc] sm:%s215] %v230
                %v232 = vld [vmem:[%s222 + $0x20] sm:%s215]
                %233 = vst [vmem:[%s223 + $0x10] sm:%s215] %v232
                %v234 = vld [vmem:[%s222 + $0x28] sm:%s215]
                %235 = vst [vmem:[%s223 + $0x14] sm:%s215] %v234
                %v236 = vld [vmem:[%s222 + $0x30] sm:%s215]
                %237 = vst [vmem:[%s223 + $0x18] sm:%s215] %v236
                %v238 = vld [vmem:[%s222 + $0x38] sm:%s215]
                %239 = vst [vmem:[%s223 + $0x1c] sm:%s215] %v238
                %v240 = vld [vmem:[%s222 + $0x40] sm:%s215]
                %241 = vst [vmem:[%s223 + $0x20] sm:%s215] %v240
                %v242 = vld [vmem:[%s222 + $0x48] sm:%s215]
                %243 = vst [vmem:[%s223 + $0x24] sm:%s215] %v242
                %v244 = vld [vmem:[%s222 + $0x50] sm:%s215]
                %245 = vst [vmem:[%s223 + $0x28] sm:%s215] %v244
                %v246 = vld [vmem:[%s222 + $0x58] sm:%s215]
                %247 = vst [vmem:[%s223 + $0x2c] sm:%s215] %v246
                %v248 = vld [vmem:[%s222 + $0x60] sm:%s215]
                %249 = vst [vmem:[%s223 + $0x30] sm:%s215] %v248
                %v250 = vld [vmem:[%s222 + $0x68] sm:%s215]
                %251 = vst [vmem:[%s223 + $0x34] sm:%s215] %v250
                %v252 = vld [vmem:[%s222 + $0x70] sm:%s215]
                %253 = vst [vmem:[%s223 + $0x38] sm:%s215] %v252
                %v254 = vld [vmem:[%s222 + $0x78] sm:%s215]
                %255 = vst [vmem:[%s223 + $0x3c] sm:%s215] %v254
              $region45: #{gin_net_forward.3} parent=39 // loop_footer
                %s221 = sadd.s32 1, %s217
              $region46: #{gin_net_forward.3} parent=39 // loop_footer_branch
                %216 = sbr.rel target = $region42
              $region47: #{gin_net_forward.3} parent=39 // loop_exit
                _
            $region40: #{gin_net_forward.3} parent=31 // pred_fallthru
              _
          $region32: #{gin_net_forward.3} parent=27 // pred_fallthru
            _
          %308 = vnop
        $region28: #{gin_net_forward.3} parent=23 // pred_fallthru
          _
        // Predicated region
        $region66: #{gin_net_forward.3} parent=23 // pred_check
          %p309 = pneg %p71
        $region67: #{gin_net_forward.3} parent=23 // pred_check_branch
          %311 = sbr.rel (%p309) target = $region69
        $region68: #{gin_net_forward.3} parent=23 // pred_region
          %s312 = smul.u32 16, %s19
          %p313 = scmp.lt.s32.totalorder %s312, 31
          %s314 = scalar_select %p313, %s312, 31
          %s315 = smul.addr %s314, 4
          %s316 = scalar_lea.vmem %s1, %s315
          %s317 = smul.u32 16, %s19
        $region69: #{gin_net_forward.3} parent=23 // pred_fallthru
          _
        // Predicated region
        $region70: #{gin_net_forward.3} parent=23 // pred_check
          %p318 = pneg %p97
        $region71: #{gin_net_forward.3} parent=23 // pred_check_branch
          %320 = sbr.rel (%p318) target = $region73
        $region72: #{gin_net_forward.3} parent=23 // pred_region
          %s321 = smul.u32 16, %s18
          %p322 = scmp.lt.s32.totalorder %s321, 31
          %s323 = scalar_select %p322, %s321, 31
          %s324 = smul.addr %s323, 8
          %s325 = scalar_lea.vmem %s2, %s324
          %s326 = smul.u32 16, %s18
        $region73: #{gin_net_forward.3} parent=23 // pred_fallthru
          _
      $region24: #{gin_net_forward.3} parent=5 // pred_fallthru
        _
      %p327 = scmp.le.s32.totalorder 1, %s11
      %p328 = scmp.lt.s32.totalorder %s11, 5
      %p329 = pnand %p327, %p328
      %p330 = pneg %p329
      // Predicated region
      $region74: #{gin_net_forward.3} parent=5 // pred_check
        _
      $region75: #{gin_net_forward.3} parent=5 // pred_check_branch
        %332 = sbr.rel (%p329) target = $region77
      $region76: #{gin_net_forward.3} parent=5 // pred_region
        %s333 = ssub.s32 %s11, 1
        %s334 = sand.u32 %s38, 1
        %s335 = sand.u32 %s38, 1
        %s336 = smul.addr %s335, 64
        %s337 = scalar_lea.vmem [#allocation3], %s336
        // Predicated region
        $region78: #{gin_net_forward.3} parent=76 // pred_check
          %p338 = pneg %p51
        $region79: #{gin_net_forward.3} parent=76 // pred_check_branch
          %340 = sbr.rel (%p338) target = $region81
        $region80: #{gin_net_forward.3} parent=76 // pred_region
          _
        $region81: #{gin_net_forward.3} parent=76 // pred_fallthru
          _
        %s341 = sand.u32 %s38, 1
        %s342 = sand.u32 %s38, 1
        %s343 = smul.addr %s342, 64
        %s344 = scalar_lea.vmem [#allocation3], %s343
        %p345 = pneg %p51
        %p346 = pneg %p48
        %s347 = smul.u32 16, %s21
        %p348 = scmp.lt.s32.totalorder %s347, 31
        %s349 = scalar_select %p348, %s347, 31
        %s350 = smul.addr %s349, 4
        %s351 = scalar_lea.vmem %s1, %s350
        %p352 = pneg %p77
        %p353 = pneg %p74
        %s354 = smul.u32 16, %s20
        %p355 = scmp.lt.s32.totalorder %s354, 31
        %s356 = scalar_select %p355, %s354, 31
        %s357 = smul.addr %s356, 8
        %s358 = scalar_lea.vmem %s2, %s357
        %p359 = pneg %p103
        %p360 = pneg %p100
        %p361 = pneg %p124
        %p362 = pneg %p121
        %p363 = pneg %p145
        %p364 = pneg %p142
        %p365 = pneg %p171
        %p366 = pneg %p168
        %s367 = smul.u32 16, %s20
        %p368 = scmp.lt.s32.totalorder %s367, 31
        %s369 = scalar_select %p368, %s367, 31
        %s370 = smul.addr %s369, 8
        %s371 = scalar_lea.vmem %s5, %s370
        %s372 = smul.u32 16, %s20
        %s373 = smul.u32 16, %s21
        %p374 = scmp.lt.s32.totalorder %s373, 31
        %s375 = scalar_select %p374, %s373, 31
        %s376 = smul.addr %s375, 4
        %s377 = scalar_lea.vmem %s1, %s376
        %s378 = smul.u32 16, %s21
        %s379 = smul.u32 16, %s20
        %p380 = scmp.lt.s32.totalorder %s379, 31
        %s381 = scalar_select %p380, %s379, 31
        %s382 = smul.addr %s381, 8
        %s383 = scalar_lea.vmem %s2, %s382
        %s384 = smul.u32 16, %s20
        %s385 = smul.u32 16, %s20
        %p386 = scmp.lt.s32.totalorder %s385, 31
        %s387 = scalar_select %p386, %s385, 31
        %s388 = smul.addr %s387, 8
        %s389 = scalar_lea.vmem %s5, %s388
        %s390 = smul.u32 16, %s20
        %p391 = scmp.eq.s32.totalorder %s21, 0
        // Predicated region
        $region82: #{gin_net_forward.3} parent=76 // pred_check
          %p392 = pneg %p391
        $region83: #{gin_net_forward.3} parent=76 // pred_check_branch
          %394 = sbr.rel (%p392) target = $region85
        $region84: #{gin_net_forward.3} parent=76 // pred_region
          %395 = vst [vmem:[#allocation2] sm:$0xff] 0.0
          %396 = vst [vmem:[#allocation2 + $0x8] sm:$0xff] 0.0
          %397 = vst [vmem:[#allocation2 + $0x10] sm:$0xff] 0.0
          %398 = vst [vmem:[#allocation2 + $0x18] sm:$0xff] 0.0
          %399 = vst [vmem:[#allocation2 + $0x20] sm:$0xff] 0.0
          %400 = vst [vmem:[#allocation2 + $0x28] sm:$0xff] 0.0
          %401 = vst [vmem:[#allocation2 + $0x30] sm:$0xff] 0.0
          %402 = vst [vmem:[#allocation2 + $0x38] sm:$0xff] 0.0
          %403 = vst [vmem:[#allocation2 + $0x40] sm:$0xff] 0.0
          %404 = vst [vmem:[#allocation2 + $0x48] sm:$0xff] 0.0
          %405 = vst [vmem:[#allocation2 + $0x50] sm:$0xff] 0.0
          %406 = vst [vmem:[#allocation2 + $0x58] sm:$0xff] 0.0
          %407 = vst [vmem:[#allocation2 + $0x60] sm:$0xff] 0.0
          %408 = vst [vmem:[#allocation2 + $0x68] sm:$0xff] 0.0
          %409 = vst [vmem:[#allocation2 + $0x70] sm:$0xff] 0.0
          %410 = vst [vmem:[#allocation2 + $0x78] sm:$0xff] 0.0
        $region85: #{gin_net_forward.3} parent=76 // pred_fallthru
          _
        %v411 = vld [vmem:[#allocation2] sm:$0xff]
        %v412 = vld [vmem:[#allocation2 + $0x8] sm:$0xff]
        %v413 = vld [vmem:[#allocation2 + $0x10] sm:$0xff]
        %v414 = vld [vmem:[#allocation2 + $0x18] sm:$0xff]
        %v415 = vld [vmem:[#allocation2 + $0x20] sm:$0xff]
        %v416 = vld [vmem:[#allocation2 + $0x28] sm:$0xff]
        %v417 = vld [vmem:[#allocation2 + $0x30] sm:$0xff]
        %v418 = vld [vmem:[#allocation2 + $0x38] sm:$0xff]
        %v419 = vld [vmem:[#allocation2 + $0x40] sm:$0xff]
        %v420 = vld [vmem:[#allocation2 + $0x48] sm:$0xff]
        %v421 = vld [vmem:[#allocation2 + $0x50] sm:$0xff]
        %v422 = vld [vmem:[#allocation2 + $0x58] sm:$0xff]
        %v423 = vld [vmem:[#allocation2 + $0x60] sm:$0xff]
        %v424 = vld [vmem:[#allocation2 + $0x68] sm:$0xff]
        %v425 = vld [vmem:[#allocation2 + $0x70] sm:$0xff]
        %v426 = vld [vmem:[#allocation2 + $0x78] sm:$0xff]
        %v427 = vld [vmem:[%s337] sm:$0xf]
        %v428 = vld [vmem:[%s337 + $0x4] sm:$0xf]
        %v429 = vld [vmem:[%s337 + $0x8] sm:$0xf]
        %v430 = vld [vmem:[%s337 + $0xc] sm:$0xf]
        %v431 = vld [vmem:[%s337 + $0x10] sm:$0xf]
        %v432 = vld [vmem:[%s337 + $0x14] sm:$0xf]
        %v433 = vld [vmem:[%s337 + $0x18] sm:$0xf]
        %v434 = vld [vmem:[%s337 + $0x1c] sm:$0xf]
        %v435 = vld [vmem:[%s337 + $0x20] sm:$0xf]
        %v436 = vld [vmem:[%s337 + $0x24] sm:$0xf]
        %v437 = vld [vmem:[%s337 + $0x28] sm:$0xf]
        %v438 = vld [vmem:[%s337 + $0x2c] sm:$0xf]
        %v439 = vld [vmem:[%s337 + $0x30] sm:$0xf]
        %v440 = vld [vmem:[%s337 + $0x34] sm:$0xf]
        %v441 = vld [vmem:[%s337 + $0x38] sm:$0xf]
        %v442 = vld [vmem:[%s337 + $0x3c] sm:$0xf]
        %v443 = vld [vmem:[%s377] sm:$0xf]
        %v444 = vld [vmem:[%s377 + $0x4] sm:$0xf]
        %v445 = vld [vmem:[%s377 + $0x8] sm:$0xf]
        %v446 = vld [vmem:[%s377 + $0xc] sm:$0xf]
        %v447 = vld [vmem:[%s377 + $0x10] sm:$0xf]
        %v448 = vld [vmem:[%s377 + $0x14] sm:$0xf]
        %v449 = vld [vmem:[%s377 + $0x18] sm:$0xf]
        %v450 = vld [vmem:[%s377 + $0x1c] sm:$0xf]
        %v451 = vld [vmem:[%s377 + $0x20] sm:$0xf]
        %v452 = vld [vmem:[%s377 + $0x24] sm:$0xf]
        %v453 = vld [vmem:[%s377 + $0x28] sm:$0xf]
        %v454 = vld [vmem:[%s377 + $0x2c] sm:$0xf]
        %v455 = vld [vmem:[%s377 + $0x30] sm:$0xf]
        %v456 = vld [vmem:[%s377 + $0x34] sm:$0xf]
        %v457 = vld [vmem:[%s377 + $0x38] sm:$0xf]
        %v458 = vld [vmem:[%s377 + $0x3c] sm:$0xf]
        %v475 = vunpack.c.l.b16 %v427
        %v476 = vunpack.c.l.b16 %v428
        %v477 = vunpack.c.l.b16 %v429
        %v478 = vunpack.c.l.b16 %v430
        %v479 = vunpack.c.l.b16 %v431
        %v480 = vunpack.c.l.b16 %v432
        %v481 = vunpack.c.l.b16 %v433
        %v482 = vunpack.c.l.b16 %v434
        %v483 = vunpack.c.l.b16 %v435
        %v484 = vunpack.c.l.b16 %v436
        %v485 = vunpack.c.l.b16 %v437
        %v486 = vunpack.c.l.b16 %v438
        %v487 = vunpack.c.l.b16 %v439
        %v488 = vunpack.c.l.b16 %v440
        %v489 = vunpack.c.l.b16 %v441
        %v490 = vunpack.c.l.b16 %v442
        %v491 = vpack.c.b16 %v476, %v475
        %v492 = vpack.c.b16 %v478, %v477
        %v493 = vpack.c.b16 %v480, %v479
        %v494 = vpack.c.b16 %v482, %v481
        %v495 = vpack.c.b16 %v484, %v483
        %v496 = vpack.c.b16 %v486, %v485
        %v497 = vpack.c.b16 %v488, %v487
        %v498 = vpack.c.b16 %v490, %v489
        %v523 = vunpack.c.l.b16 %v443
        %v524 = vunpack.c.l.b16 %v444
        %v525 = vunpack.c.l.b16 %v445
        %v526 = vunpack.c.l.b16 %v446
        %v527 = vunpack.c.l.b16 %v447
        %v528 = vunpack.c.l.b16 %v448
        %v529 = vunpack.c.l.b16 %v449
        %v530 = vunpack.c.l.b16 %v450
        %v531 = vunpack.c.l.b16 %v451
        %v532 = vunpack.c.l.b16 %v452
        %v533 = vunpack.c.l.b16 %v453
        %v534 = vunpack.c.l.b16 %v454
        %v535 = vunpack.c.l.b16 %v455
        %v536 = vunpack.c.l.b16 %v456
        %v537 = vunpack.c.l.b16 %v457
        %v538 = vunpack.c.l.b16 %v458
        %v539 = vpack.c.b16 %v524, %v523
        %v540 = vpack.c.b16 %v526, %v525
        %v541 = vpack.c.b16 %v528, %v527
        %v542 = vpack.c.b16 %v530, %v529
        %v543 = vpack.c.b16 %v532, %v531
        %v544 = vpack.c.b16 %v534, %v533
        %v545 = vpack.c.b16 %v536, %v535
        %v546 = vpack.c.b16 %v538, %v537
        %555 = vmatpush.bf16.msra.mxu0 %v546
        %556 = vmatpush.bf16.msra.mxu0 %v545
        %557 = vmatpush.bf16.msra.mxu0 %v544
        %558 = vmatpush.bf16.msra.mxu0 %v543
        %559 = vmatpush.bf16.msra.mxu0 %v542
        %560 = vmatpush.bf16.msra.mxu0 %v541
        %561 = vmatpush.bf16.msra.mxu0 %v540
        %562 = vmatpush.bf16.msra.mxu0 %v539
        %563 = vmatmul.bf16.gmra.mxu0 %v491
        %v564 = vpop.f32.mrf.mxu0
        %v565 = vadd.f32 0.0, %v564
        %v566 = vpop.f32.mrf.mxu0
        %v567 = vadd.f32 0.0, %v566
        %568 = vmatmul.bf16.gmra.mxu0 %v492
        %v569 = vpop.f32.mrf.mxu0
        %v570 = vadd.f32 0.0, %v569
        %v571 = vpop.f32.mrf.mxu0
        %v572 = vadd.f32 0.0, %v571
        %573 = vmatmul.bf16.gmra.mxu0 %v493
        %v574 = vpop.f32.mrf.mxu0
        %v575 = vadd.f32 0.0, %v574
        %v576 = vpop.f32.mrf.mxu0
        %v577 = vadd.f32 0.0, %v576
        %578 = vmatmul.bf16.gmra.mxu0 %v494
        %v579 = vpop.f32.mrf.mxu0
        %v580 = vadd.f32 0.0, %v579
        %v581 = vpop.f32.mrf.mxu0
        %v582 = vadd.f32 0.0, %v581
        %583 = vmatmul.bf16.gmra.mxu0 %v495
        %v584 = vpop.f32.mrf.mxu0
        %v585 = vadd.f32 0.0, %v584
        %v586 = vpop.f32.mrf.mxu0
        %v587 = vadd.f32 0.0, %v586
        %588 = vmatmul.bf16.gmra.mxu0 %v496
        %v589 = vpop.f32.mrf.mxu0
        %v590 = vadd.f32 0.0, %v589
        %v591 = vpop.f32.mrf.mxu0
        %v592 = vadd.f32 0.0, %v591
        %593 = vmatmul.bf16.gmra.mxu0 %v497
        %v594 = vpop.f32.mrf.mxu0
        %v595 = vadd.f32 0.0, %v594
        %v596 = vpop.f32.mrf.mxu0
        %v597 = vadd.f32 0.0, %v596
        %598 = vmatmul.bf16.gmra.mxu0 %v498
        %v599 = vpop.f32.mrf.mxu0
        %v600 = vadd.f32 0.0, %v599
        %v601 = vpop.f32.mrf.mxu0
        %v602 = vadd.f32 0.0, %v601
        %603 = vdwg.mxu0
        %v604 = vadd.f32 %v411, %v565
        %v605 = vadd.f32 %v412, %v567
        %v606 = vadd.f32 %v413, %v570
        %v607 = vadd.f32 %v414, %v572
        %v608 = vadd.f32 %v415, %v575
        %v609 = vadd.f32 %v416, %v577
        %v610 = vadd.f32 %v417, %v580
        %v611 = vadd.f32 %v418, %v582
        %v612 = vadd.f32 %v419, %v585
        %v613 = vadd.f32 %v420, %v587
        %v614 = vadd.f32 %v421, %v590
        %v615 = vadd.f32 %v422, %v592
        %v616 = vadd.f32 %v423, %v595
        %v617 = vadd.f32 %v424, %v597
        %v618 = vadd.f32 %v425, %v600
        %v619 = vadd.f32 %v426, %v602
        %620 = vst [vmem:[#allocation2] sm:$0xff] %v604
        %621 = vst [vmem:[#allocation2 + $0x8] sm:$0xff] %v605
        %622 = vst [vmem:[#allocation2 + $0x10] sm:$0xff] %v606
        %623 = vst [vmem:[#allocation2 + $0x18] sm:$0xff] %v607
        %624 = vst [vmem:[#allocation2 + $0x20] sm:$0xff] %v608
        %625 = vst [vmem:[#allocation2 + $0x28] sm:$0xff] %v609
        %626 = vst [vmem:[#allocation2 + $0x30] sm:$0xff] %v610
        %627 = vst [vmem:[#allocation2 + $0x38] sm:$0xff] %v611
        %628 = vst [vmem:[#allocation2 + $0x40] sm:$0xff] %v612
        %629 = vst [vmem:[#allocation2 + $0x48] sm:$0xff] %v613
        %630 = vst [vmem:[#allocation2 + $0x50] sm:$0xff] %v614
        %631 = vst [vmem:[#allocation2 + $0x58] sm:$0xff] %v615
        %632 = vst [vmem:[#allocation2 + $0x60] sm:$0xff] %v616
        %633 = vst [vmem:[#allocation2 + $0x68] sm:$0xff] %v617
        %634 = vst [vmem:[#allocation2 + $0x70] sm:$0xff] %v618
        %635 = vst [vmem:[#allocation2 + $0x78] sm:$0xff] %v619
        %p636 = scmp.eq.s32.totalorder %s21, 1
        // Predicated region
        $region86: #{gin_net_forward.3} parent=76 // pred_check
          %p637 = pneg %p636
        $region87: #{gin_net_forward.3} parent=76 // pred_check_branch
          %639 = sbr.rel (%p637) target = $region89
        $region88: #{gin_net_forward.3} parent=76 // pred_region
          %v640 = vld [vmem:[%s383] sm:$0xff]
          %v641 = vld [vmem:[%s383 + $0x8] sm:$0xff]
          %v642 = vld [vmem:[%s383 + $0x10] sm:$0xff]
          %v643 = vld [vmem:[%s383 + $0x18] sm:$0xff]
          %v644 = vld [vmem:[%s383 + $0x20] sm:$0xff]
          %v645 = vld [vmem:[%s383 + $0x28] sm:$0xff]
          %v646 = vld [vmem:[%s383 + $0x30] sm:$0xff]
          %v647 = vld [vmem:[%s383 + $0x38] sm:$0xff]
          %v648 = vld [vmem:[%s383 + $0x40] sm:$0xff]
          %v649 = vld [vmem:[%s383 + $0x48] sm:$0xff]
          %v650 = vld [vmem:[%s383 + $0x50] sm:$0xff]
          %v651 = vld [vmem:[%s383 + $0x58] sm:$0xff]
          %v652 = vld [vmem:[%s383 + $0x60] sm:$0xff]
          %v653 = vld [vmem:[%s383 + $0x68] sm:$0xff]
          %v654 = vld [vmem:[%s383 + $0x70] sm:$0xff]
          %v655 = vld [vmem:[%s383 + $0x78] sm:$0xff]
          %v656 = vld [vmem:[#allocation2] sm:$0xff]
          %v657 = vld [vmem:[#allocation2 + $0x8] sm:$0xff]
          %v658 = vld [vmem:[#allocation2 + $0x10] sm:$0xff]
          %v659 = vld [vmem:[#allocation2 + $0x18] sm:$0xff]
          %v660 = vld [vmem:[#allocation2 + $0x20] sm:$0xff]
          %v661 = vld [vmem:[#allocation2 + $0x28] sm:$0xff]
          %v662 = vld [vmem:[#allocation2 + $0x30] sm:$0xff]
          %v663 = vld [vmem:[#allocation2 + $0x38] sm:$0xff]
          %v664 = vld [vmem:[#allocation2 + $0x40] sm:$0xff]
          %v665 = vld [vmem:[#allocation2 + $0x48] sm:$0xff]
          %v666 = vld [vmem:[#allocation2 + $0x50] sm:$0xff]
          %v667 = vld [vmem:[#allocation2 + $0x58] sm:$0xff]
          %v668 = vld [vmem:[#allocation2 + $0x60] sm:$0xff]
          %v669 = vld [vmem:[#allocation2 + $0x68] sm:$0xff]
          %v670 = vld [vmem:[#allocation2 + $0x70] sm:$0xff]
          %v671 = vld [vmem:[#allocation2 + $0x78] sm:$0xff]
          %v672 = vadd.f32 %v640, %v656
          %v673 = vadd.f32 %v641, %v657
          %v674 = vadd.f32 %v642, %v658
          %v675 = vadd.f32 %v643, %v659
          %v676 = vadd.f32 %v644, %v660
          %v677 = vadd.f32 %v645, %v661
          %v678 = vadd.f32 %v646, %v662
          %v679 = vadd.f32 %v647, %v663
          %v680 = vadd.f32 %v648, %v664
          %v681 = vadd.f32 %v649, %v665
          %v682 = vadd.f32 %v650, %v666
          %v683 = vadd.f32 %v651, %v667
          %v684 = vadd.f32 %v652, %v668
          %v685 = vadd.f32 %v653, %v669
          %v686 = vadd.f32 %v654, %v670
          %v687 = vadd.f32 %v655, %v671
          %v688 = vld [vmem:[%s3] sm:$0xff]
          %v689 = vld [vmem:[%s3 + $0x8] sm:$0xff]
          %v690 = vld [vmem:[%s3 + $0x10] sm:$0xff]
          %v691 = vld [vmem:[%s3 + $0x18] sm:$0xff]
          %v692 = vld [vmem:[%s3 + $0x20] sm:$0xff]
          %v693 = vld [vmem:[%s3 + $0x28] sm:$0xff]
          %v694 = vld [vmem:[%s3 + $0x30] sm:$0xff]
          %v695 = vld [vmem:[%s3 + $0x38] sm:$0xff]
          %v696 = vld [vmem:[%s3 + $0x40] sm:$0xff]
          %v697 = vld [vmem:[%s3 + $0x48] sm:$0xff]
          %v698 = vld [vmem:[%s3 + $0x50] sm:$0xff]
          %v699 = vld [vmem:[%s3 + $0x58] sm:$0xff]
          %v700 = vld [vmem:[%s3 + $0x60] sm:$0xff]
          %v701 = vld [vmem:[%s3 + $0x68] sm:$0xff]
          %v702 = vld [vmem:[%s3 + $0x70] sm:$0xff]
          %v703 = vld [vmem:[%s3 + $0x78] sm:$0xff]
          %v704 = vld [vmem:[%s4] sm:$0x1]
          %v706 = vperm.slane %v704, 0
          %708 = vmatpush.msra.mxu0 %v703
          %709 = vmatpush.msra.mxu0 %v702
          %710 = vmatpush.msra.mxu0 %v701
          %711 = vmatpush.msra.mxu0 %v700
          %712 = vmatpush.msra.mxu0 %v699
          %713 = vmatpush.msra.mxu0 %v698
          %714 = vmatpush.msra.mxu0 %v697
          %715 = vmatpush.msra.mxu0 %v696
          %716 = vmatpush.msra.mxu0 %v695
          %717 = vmatpush.msra.mxu0 %v694
          %718 = vmatpush.msra.mxu0 %v693
          %719 = vmatpush.msra.mxu0 %v692
          %720 = vmatpush.msra.mxu0 %v691
          %721 = vmatpush.msra.mxu0 %v690
          %722 = vmatpush.msra.mxu0 %v689
          %723 = vmatpush.msra.mxu0 %v688
          %724 = vmatmul.f32.gmra.mxu0 %v672
          %v725 = vpop.f32.mrf.mxu0
          %v726 = vadd.f32 %v706, %v725
          %727 = vmatmul.f32.gmra.mxu0 %v673
          %v728 = vpop.f32.mrf.mxu0
          %v729 = vadd.f32 %v706, %v728
          %730 = vmatmul.f32.gmra.mxu0 %v674
          %v731 = vpop.f32.mrf.mxu0
          %v732 = vadd.f32 %v706, %v731
          %733 = vmatmul.f32.gmra.mxu0 %v675
          %v734 = vpop.f32.mrf.mxu0
          %v735 = vadd.f32 %v706, %v734
          %736 = vmatmul.f32.gmra.mxu0 %v676
          %v737 = vpop.f32.mrf.mxu0
          %v738 = vadd.f32 %v706, %v737
          %739 = vmatmul.f32.gmra.mxu0 %v677
          %v740 = vpop.f32.mrf.mxu0
          %v741 = vadd.f32 %v706, %v740
          %742 = vmatmul.f32.gmra.mxu0 %v678
          %v743 = vpop.f32.mrf.mxu0
          %v744 = vadd.f32 %v706, %v743
          %745 = vmatmul.f32.gmra.mxu0 %v679
          %v746 = vpop.f32.mrf.mxu0
          %v747 = vadd.f32 %v706, %v746
          %748 = vmatmul.f32.gmra.mxu0 %v680
          %v749 = vpop.f32.mrf.mxu0
          %v750 = vadd.f32 %v706, %v749
          %751 = vmatmul.f32.gmra.mxu0 %v681
          %v752 = vpop.f32.mrf.mxu0
          %v753 = vadd.f32 %v706, %v752
          %754 = vmatmul.f32.gmra.mxu0 %v682
          %v755 = vpop.f32.mrf.mxu0
          %v756 = vadd.f32 %v706, %v755
          %757 = vmatmul.f32.gmra.mxu0 %v683
          %v758 = vpop.f32.mrf.mxu0
          %v759 = vadd.f32 %v706, %v758
          %760 = vmatmul.f32.gmra.mxu0 %v684
          %v761 = vpop.f32.mrf.mxu0
          %v762 = vadd.f32 %v706, %v761
          %763 = vmatmul.f32.gmra.mxu0 %v685
          %v764 = vpop.f32.mrf.mxu0
          %v765 = vadd.f32 %v706, %v764
          %766 = vmatmul.f32.gmra.mxu0 %v686
          %v767 = vpop.f32.mrf.mxu0
          %v768 = vadd.f32 %v706, %v767
          %769 = vmatmul.f32.gmra.mxu0 %v687
          %v770 = vpop.f32.mrf.mxu0
          %v771 = vadd.f32 %v706, %v770
          %772 = vdwg.mxu0
          %773 = vst [vmem:[%s389] sm:$0xff] %v726
          %774 = vst [vmem:[%s389 + $0x8] sm:$0xff] %v729
          %775 = vst [vmem:[%s389 + $0x10] sm:$0xff] %v732
          %776 = vst [vmem:[%s389 + $0x18] sm:$0xff] %v735
          %777 = vst [vmem:[%s389 + $0x20] sm:$0xff] %v738
          %778 = vst [vmem:[%s389 + $0x28] sm:$0xff] %v741
          %779 = vst [vmem:[%s389 + $0x30] sm:$0xff] %v744
          %780 = vst [vmem:[%s389 + $0x38] sm:$0xff] %v747
          %781 = vst [vmem:[%s389 + $0x40] sm:$0xff] %v750
          %782 = vst [vmem:[%s389 + $0x48] sm:$0xff] %v753
          %783 = vst [vmem:[%s389 + $0x50] sm:$0xff] %v756
          %784 = vst [vmem:[%s389 + $0x58] sm:$0xff] %v759
          %785 = vst [vmem:[%s389 + $0x60] sm:$0xff] %v762
          %786 = vst [vmem:[%s389 + $0x68] sm:$0xff] %v765
          %787 = vst [vmem:[%s389 + $0x70] sm:$0xff] %v768
          %788 = vst [vmem:[%s389 + $0x78] sm:$0xff] %v771
        $region89: #{gin_net_forward.3} parent=76 // pred_fallthru
          _
        %s789 = smul.u32 16, %s20
        %p790 = scmp.lt.s32.totalorder %s789, 31
        %s791 = scalar_select %p790, %s789, 31
        %s792 = smul.addr %s791, 8
        %s793 = scalar_lea.vmem %s5, %s792
        // Predicated region
        $region90: #{gin_net_forward.3} parent=76 // pred_check
          %p794 = pneg %p168
        $region91: #{gin_net_forward.3} parent=76 // pred_check_branch
          %796 = sbr.rel (%p794) target = $region93
        $region92: #{gin_net_forward.3} parent=76 // pred_region
          %s797 = smul.u32 16, %s20
        $region93: #{gin_net_forward.3} parent=76 // pred_fallthru
          _
      $region77: #{gin_net_forward.3} parent=5 // pred_fallthru
        _
      %p798 = scmp.le.s32.totalorder 2, %s11
      // Predicated region
      $region94: #{gin_net_forward.3} parent=5 // pred_check
        %p799 = pneg %p798
      $region95: #{gin_net_forward.3} parent=5 // pred_check_branch
        %801 = sbr.rel (%p799) target = $region97
      $region96: #{gin_net_forward.3} parent=5 // pred_region
        %s802 = ssub.s32 %s11, 2
        // Predicated region
        $region98: #{gin_net_forward.3} parent=96 // pred_check
          %p803 = pneg %p174
        $region99: #{gin_net_forward.3} parent=96 // pred_check_branch
          %805 = sbr.rel (%p803) target = $region101
        $region100: #{gin_net_forward.3} parent=96 // pred_region
          %s806 = smul.u32 16, %s22
          %p807 = scmp.lt.s32.totalorder %s806, 31
          %s808 = scalar_select %p807, %s806, 31
          %s809 = smul.addr %s808, 8
          %s810 = scalar_lea.vmem %s5, %s809
        $region101: #{gin_net_forward.3} parent=96 // pred_fallthru
          _
      $region97: #{gin_net_forward.3} parent=5 // pred_fallthru
        _
    $region6: #{gin_net_forward.3} parent=1 // loop_footer
      %s15 = sadd.s32 1, %s11
    $region7: #{gin_net_forward.3} parent=1 // loop_footer_branch
      %10 = sbr.rel target = $region3
    $region8: #{gin_net_forward.3} parent=1 // loop_exit
      _

</llo_original>
